<compile_context>
chip_gen: v5e
topology: v5e:2x2
jax: 0.10.0
libtpu: 0.0.40
codegen_flags: <defaults>
</compile_context>

<pallas_src>
import jax
import jax.numpy as jnp
from jax import lax
from jax.experimental import pallas as pl
from jax.experimental.pallas import tpu as pltpu


_STRIP = 128                      # in-kernel strip edge (one lane width)
_MIN_PALLAS_DIM = 128             # both swapped dims must be lane-dense
_MIN_PALLAS_BYTES = 128 * 1024    # below this, launch overhead dominates
_TILE_BYTES_TARGET = 1 << 20      # ~1 MiB payload per tile per tensor
_TILE_BYTES_MAX = 2 << 20         # cap: <= 8 MiB for double-buffered in+out


def _round_up(n, m):
    return ((n + m - 1) // m) * m


def _pick_tiles(C, L, itemsize):
    """Dtype-aware (tc, tl); both are multiples of 128.

    Targets ~1 MiB of payload per tile regardless of dtype (512x512 f32,
    512x1024 bf16, 512x2048 int8), then grows either side to the full array
    extent while the tile stays under _TILE_BYTES_MAX: a full-extent minor
    dim turns the strided per-row HBM DMA into one contiguous transfer per
    block, removes ragged edge tiles on that side and cuts grid-step count.
    """
    c_full = _round_up(C, _STRIP)
    l_full = _round_up(L, _STRIP)

    tc = min(c_full, 512)
    tl_target = _round_up(max(_STRIP, _TILE_BYTES_TARGET // (512 * itemsize)),
                          _STRIP)
    tl = min(l_full, tl_target)

    # Full-extent growth: L first (input minor dim -> contiguous input DMA),
    # then C (output minor dim -> long unmasked lane-dense output stores).
    if tc * l_full * itemsize <= _TILE_BYTES_MAX:
        tl = l_full
    if c_full * tl * itemsize <= _TILE_BYTES_MAX:
        tc = c_full
    return tc, tl


def _transpose_kernel(x_ref, o_ref):
    """x_ref: (tc, tl) input tile; o_ref: (tl, tc) output tile (batch squeezed).

    Strip-wise transpose over (128, 128) sub-blocks: each sub-block keeps the
    load -> vxpose -> store chain inside ~16 vregs so Mosaic never spills or
    stages a multi-hundred-vreg tile through a hidden VMEM temporary.
    """
    tc, tl = x_ref.shape
    n_r = tc // _STRIP
    n_c = tl // _STRIP

    def row_body(r, carry):
        r0 = pl.multiple_of(r * _STRIP, _STRIP)

        def col_body(c, inner):
            c0 = pl.multiple_of(c * _STRIP, _STRIP)
            o_ref[pl.ds(c0, _STRIP), pl.ds(r0, _STRIP)] = (
                x_ref[pl.ds(r0, _STRIP), pl.ds(c0, _STRIP)].T
            )
            return inner

        lax.fori_loop(0, n_c, col_body, 0, unroll=(n_c <= 8))
        return carry

    lax.fori_loop(0, n_r, row_body, 0, unroll=(n_r <= 4))
    # TODO(synk): if a v7x bundle dump shows XLU extended slots saturating
    # (kernel no longer HBM-bound at 3.2 TB/s), route the per-block transpose
    # through the idle MXU via a cached identity tile for bf16/int8 inputs.


@jax.jit
def _transpose_1_2_pallas(x):
    """(B, C, L) -> (B, L, C) via a tiled on-chip transpose."""
    B, C, L = x.shape
    itemsize = jnp.dtype(x.dtype).itemsize
    tc, tl = _pick_tiles(C, L, itemsize)
    n_c = pl.cdiv(C, tc)
    n_l = pl.cdiv(L, tl)

    tile_bytes = tc * tl * itemsize
    # Double-buffered input + output tiles plus headroom; raised explicitly so
    # v5e's 16 MiB default scoped VMEM never forces the compiler to shrink
    # buffering, while staying inside every generation's physical VMEM.
    vmem_limit = int(min(32 << 20, max(16 << 20, 8 * tile_bytes + (4 << 20))))

    return pl.pallas_call(
        _transpose_kernel,
        out_shape=jax.ShapeDtypeStruct((B, L, C), x.dtype),
        grid_spec=pltpu.PrefetchScalarGridSpec(
            num_scalar_prefetch=0,
            # L-tile index j innermost: consecutive input DMAs walk contiguous
            # HBM stripes of the (C, L) slab.
            grid=(B, n_c, n_l),
            in_specs=[
                pl.BlockSpec((pl.Squeezed(), tc, tl),
                             lambda b, i, j: (b, i, j)),
                # TODO(synk): A/B pipeline_mode=pl.Buffered(3) on this spec if
                # a trace shows exposed DMA turnaround at tile-row boundaries.
            ],
            # Swapped tile indices: input tile (i, j) lands at output (j, i).
            out_specs=pl.BlockSpec((pl.Squeezed(), tl, tc),
                                   lambda b, i, j: (b, j, i)),
        ),
        compiler_params=pltpu.CompilerParams(
            # Every output block is written exactly once -> all axes parallel.
            # TODO(synk): on v7x, verify in a trace that the grid shards across
            # both TensorCores; if not, mark the largest axis CORE_PARALLEL.
            dimension_semantics=("parallel", "parallel", "parallel"),
            vmem_limit_bytes=vmem_limit,
        ),
        cost_estimate=pl.CostEstimate(
            flops=0,
            transcendentals=0,
            bytes_accessed=2 * B * C * L * itemsize,
        ),
    )(x)


def transpose_1_2(x):
    """Pallas equivalent of Transpose(1, 2, contiguous=True) on a 3-D tensor.

    Narrow (C or L < 128 -> lane-masked stores) or tiny tensors fall back to
    jnp.swapaxes.  NOTE: the fallback is only a free layout change when it is
    traced together with its consumer under an enclosing jax.jit; called
    eagerly it is a full HBM read+write copy.
    """
    B, C, L = x.shape
    use_pallas = (
        C >= _MIN_PALLAS_DIM
        and L >= _MIN_PALLAS_DIM
        and x.size * jnp.dtype(x.dtype).itemsize >= _MIN_PALLAS_BYTES
    )
    if use_pallas:
        return _transpose_1_2_pallas(x)
    return jnp.swapaxes(x, 1, 2)


class Transpose:
    """JAX/Pallas mirror of the PyTorch Transpose module.

    The (1, 2) swap on 3-D tensors (the case used in hgrureal1d) dispatches to
    the tiled Pallas kernel when it is large / lane-dense enough; `contiguous`
    is a no-op distinction in JAX (results are always dense).
    """

    def __init__(self, *dims, contiguous=False):
        self.dims = dims
        self.contiguous = contiguous

    def __call__(self, x):
        d0, d1 = (d % x.ndim for d in self.dims)
        if x.ndim == 3 and sorted((d0, d1)) == [1, 2]:
            return transpose_1_2(x)
        # TODO(synk): other (ndim, dims) combos fall back to plain jnp.swapaxes.
        return jnp.swapaxes(x, d0, d1)


if __name__ == "__main__":
    key = jax.random.PRNGKey(0)
    k0, k1, k2, k3 = jax.random.split(key, 4)

    mod = Transpose(1, 2, contiguous=True)

    # 1) Pallas path, f32: full-extent tile (256, 1024), grid (2, 1, 1).
    B, C, L = 2, 256, 1024
    x = jax.random.normal(k0, (B, C, L), dtype=jnp.float32)
    y = jax.block_until_ready(mod(x))
    assert y.shape == (B, L, C), y.shape
    assert y.dtype == x.dtype
    assert jnp.array_equal(y, jnp.swapaxes(x, 1, 2)), "f32 Pallas transpose mismatch"

    # 2) Pallas path, f32 multi-tile grid: tile (384, 512), grid (1, 1, 3)
    #    exercises the swapped (j, i) output index map.
    x2 = jax.random.normal(k1, (1, 384, 1536), dtype=jnp.float32)
    y2 = jax.block_until_ready(mod(x2))
    assert y2.shape == (1, 1536, 384), y2.shape
    assert jnp.array_equal(y2, jnp.swapaxes(x2, 1, 2)), "multi-tile transpose mismatch"

    # 3) Pallas path, ragged bf16 shape (masked edge blocks on both dims).
    xr = jax.random.normal(k2, (2, 200, 333), dtype=jnp.bfloat16)
    yr = jax.block_until_ready(mod(xr))
    assert yr.shape == (2, 333, 200), yr.shape
    assert jnp.array_equal(yr, jnp.swapaxes(xr, 1, 2)), "ragged bf16 transpose mismatch"

    # 4) Small-channel hgru case (C=8): dispatches to the jnp.swapaxes fallback.
    xs = jax.random.normal(k3, (2, 8, 128), dtype=jnp.float32)
    ys = jax.block_until_ready(mod(xs))
    assert ys.shape == (2, 128, 8), ys.shape
    assert jnp.array_equal(ys, jnp.swapaxes(xs, 1, 2)), "small-C fallback mismatch"

    print("KERNEL_OK")
</pallas_src>

<mosaic_0001>
module attributes {stable_mosaic.version = 11 : i64} {
  func.func @_transpose_kernel(%arg0: i32, %arg1: i32, %arg2: i32, %arg3: memref<1x256x1024xf32, #tpu.memory_space<vmem>>, %arg4: memref<1x1024x256xf32, #tpu.memory_space<vmem>>) attributes {dimension_semantics = [#tpu.dimension_semantics<parallel>, #tpu.dimension_semantics<parallel>, #tpu.dimension_semantics<parallel>], iteration_bounds = array<i64: 2, 1, 1>, scalar_prefetch = 0 : i64, scratch_operands = 0 : i64, tpu.core_type = #tpu.core_type<tc>, window_params = [{transform_indices = @transform_0, window_bounds = array<i64: 1, 256, 1024>}, {transform_indices = @transform_1, window_bounds = array<i64: 1, 1024, 256>}]} {
    %c0_i32 = arith.constant 0 : i32
    %c128_i32 = arith.constant 128 : i32
    %0 = arith.muli %c0_i32, %c128_i32 : i32
    %1 = tpu.assume_multiple %0, 128 : i32
    %c0_i32_0 = arith.constant 0 : i32
    %c128_i32_1 = arith.constant 128 : i32
    %2 = arith.muli %c0_i32_0, %c128_i32_1 : i32
    %3 = tpu.assume_multiple %2, 128 : i32
    %c0 = arith.constant 0 : index
    %4 = arith.index_cast %1 : i32 to index
    %5 = arith.index_cast %3 : i32 to index
    %6 = vector.load %arg3[%c0, %4, %5] : memref<1x256x1024xf32, #tpu.memory_space<vmem>>, vector<1x128x128xf32>
    %7 = vector.shape_cast %6 : vector<1x128x128xf32> to vector<128x128xf32>
    %8 = tpu.transpose %7, [1, 0] : vector<128x128xf32> -> vector<128x128xf32>
    %c0_2 = arith.constant 0 : index
    %9 = arith.index_cast %3 : i32 to index
    %10 = arith.index_cast %1 : i32 to index
    %11 = vector.load %arg4[%c0_2, %9, %10] : memref<1x1024x256xf32, #tpu.memory_space<vmem>>, vector<1x128x128xf32>
    %12 = vector.shape_cast %11 : vector<1x128x128xf32> to vector<128x128xf32>
    %13 = vector.shape_cast %8 : vector<128x128xf32> to vector<1x128x128xf32>
    tpu.vector_store %arg4[%c0_2, %9, %10], %13 {strides = array<i32>} : memref<1x1024x256xf32, #tpu.memory_space<vmem>>, vector<1x128x128xf32>,
    %c1_i32 = arith.constant 1 : i32
    %c128_i32_3 = arith.constant 128 : i32
    %14 = arith.muli %c1_i32, %c128_i32_3 : i32
    %15 = tpu.assume_multiple %14, 128 : i32
    %c0_4 = arith.constant 0 : index
    %16 = arith.index_cast %1 : i32 to index
    %17 = arith.index_cast %15 : i32 to index
    %18 = vector.load %arg3[%c0_4, %16, %17] : memref<1x256x1024xf32, #tpu.memory_space<vmem>>, vector<1x128x128xf32>
    %19 = vector.shape_cast %18 : vector<1x128x128xf32> to vector<128x128xf32>
    %20 = tpu.transpose %19, [1, 0] : vector<128x128xf32> -> vector<128x128xf32>
    %c0_5 = arith.constant 0 : index
    %21 = arith.index_cast %15 : i32 to index
    %22 = arith.index_cast %1 : i32 to index
    %23 = vector.load %arg4[%c0_5, %21, %22] : memref<1x1024x256xf32, #tpu.memory_space<vmem>>, vector<1x128x128xf32>
    %24 = vector.shape_cast %23 : vector<1x128x128xf32> to vector<128x128xf32>
    %25 = vector.shape_cast %20 : vector<128x128xf32> to vector<1x128x128xf32>
    tpu.vector_store %arg4[%c0_5, %21, %22], %25 {strides = array<i32>} : memref<1x1024x256xf32, #tpu.memory_space<vmem>>, vector<1x128x128xf32>,
    %c2_i32 = arith.constant 2 : i32
    %c128_i32_6 = arith.constant 128 : i32
    %26 = arith.muli %c2_i32, %c128_i32_6 : i32
    %27 = tpu.assume_multiple %26, 128 : i32
    %c0_7 = arith.constant 0 : index
    %28 = arith.index_cast %1 : i32 to index
    %29 = arith.index_cast %27 : i32 to index
    %30 = vector.load %arg3[%c0_7, %28, %29] : memref<1x256x1024xf32, #tpu.memory_space<vmem>>, vector<1x128x128xf32>
    %31 = vector.shape_cast %30 : vector<1x128x128xf32> to vector<128x128xf32>
    %32 = tpu.transpose %31, [1, 0] : vector<128x128xf32> -> vector<128x128xf32>
    %c0_8 = arith.constant 0 : index
    %33 = arith.index_cast %27 : i32 to index
    %34 = arith.index_cast %1 : i32 to index
    %35 = vector.load %arg4[%c0_8, %33, %34] : memref<1x1024x256xf32, #tpu.memory_space<vmem>>, vector<1x128x128xf32>
    %36 = vector.shape_cast %35 : vector<1x128x128xf32> to vector<128x128xf32>
    %37 = vector.shape_cast %32 : vector<128x128xf32> to vector<1x128x128xf32>
    tpu.vector_store %arg4[%c0_8, %33, %34], %37 {strides = array<i32>} : memref<1x1024x256xf32, #tpu.memory_space<vmem>>, vector<1x128x128xf32>,
    %c3_i32 = arith.constant 3 : i32
    %c128_i32_9 = arith.constant 128 : i32
    %38 = arith.muli %c3_i32, %c128_i32_9 : i32
    %39 = tpu.assume_multiple %38, 128 : i32
    %c0_10 = arith.constant 0 : index
    %40 = arith.index_cast %1 : i32 to index
    %41 = arith.index_cast %39 : i32 to index
    %42 = vector.load %arg3[%c0_10, %40, %41] : memref<1x256x1024xf32, #tpu.memory_space<vmem>>, vector<1x128x128xf32>
    %43 = vector.shape_cast %42 : vector<1x128x128xf32> to vector<128x128xf32>
    %44 = tpu.transpose %43, [1, 0] : vector<128x128xf32> -> vector<128x128xf32>
    %c0_11 = arith.constant 0 : index
    %45 = arith.index_cast %39 : i32 to index
    %46 = arith.index_cast %1 : i32 to index
    %47 = vector.load %arg4[%c0_11, %45, %46] : memref<1x1024x256xf32, #tpu.memory_space<vmem>>, vector<1x128x128xf32>
    %48 = vector.shape_cast %47 : vector<1x128x128xf32> to vector<128x128xf32>
    %49 = vector.shape_cast %44 : vector<128x128xf32> to vector<1x128x128xf32>
    tpu.vector_store %arg4[%c0_11, %45, %46], %49 {strides = array<i32>} : memref<1x1024x256xf32, #tpu.memory_space<vmem>>, vector<1x128x128xf32>,
    %c4_i32 = arith.constant 4 : i32
    %c128_i32_12 = arith.constant 128 : i32
    %50 = arith.muli %c4_i32, %c128_i32_12 : i32
    %51 = tpu.assume_multiple %50, 128 : i32
    %c0_13 = arith.constant 0 : index
    %52 = arith.index_cast %1 : i32 to index
    %53 = arith.index_cast %51 : i32 to index
    %54 = vector.load %arg3[%c0_13, %52, %53] : memref<1x256x1024xf32, #tpu.memory_space<vmem>>, vector<1x128x128xf32>
    %55 = vector.shape_cast %54 : vector<1x128x128xf32> to vector<128x128xf32>
    %56 = tpu.transpose %55, [1, 0] : vector<128x128xf32> -> vector<128x128xf32>
    %c0_14 = arith.constant 0 : index
    %57 = arith.index_cast %51 : i32 to index
    %58 = arith.index_cast %1 : i32 to index
    %59 = vector.load %arg4[%c0_14, %57, %58] : memref<1x1024x256xf32, #tpu.memory_space<vmem>>, vector<1x128x128xf32>
    %60 = vector.shape_cast %59 : vector<1x128x128xf32> to vector<128x128xf32>
    %61 = vector.shape_cast %56 : vector<128x128xf32> to vector<1x128x128xf32>
    tpu.vector_store %arg4[%c0_14, %57, %58], %61 {strides = array<i32>} : memref<1x1024x256xf32, #tpu.memory_space<vmem>>, vector<1x128x128xf32>,
    %c5_i32 = arith.constant 5 : i32
    %c128_i32_15 = arith.constant 128 : i32
    %62 = arith.muli %c5_i32, %c128_i32_15 : i32
    %63 = tpu.assume_multiple %62, 128 : i32
    %c0_16 = arith.constant 0 : index
    %64 = arith.index_cast %1 : i32 to index
    %65 = arith.index_cast %63 : i32 to index
    %66 = vector.load %arg3[%c0_16, %64, %65] : memref<1x256x1024xf32, #tpu.memory_space<vmem>>, vector<1x128x128xf32>
    %67 = vector.shape_cast %66 : vector<1x128x128xf32> to vector<128x128xf32>
    %68 = tpu.transpose %67, [1, 0] : vector<128x128xf32> -> vector<128x128xf32>
    %c0_17 = arith.constant 0 : index
    %69 = arith.index_cast %63 : i32 to index
    %70 = arith.index_cast %1 : i32 to index
    %71 = vector.load %arg4[%c0_17, %69, %70] : memref<1x1024x256xf32, #tpu.memory_space<vmem>>, vector<1x128x128xf32>
    %72 = vector.shape_cast %71 : vector<1x128x128xf32> to vector<128x128xf32>
    %73 = vector.shape_cast %68 : vector<128x128xf32> to vector<1x128x128xf32>
    tpu.vector_store %arg4[%c0_17, %69, %70], %73 {strides = array<i32>} : memref<1x1024x256xf32, #tpu.memory_space<vmem>>, vector<1x128x128xf32>,
    %c6_i32 = arith.constant 6 : i32
    %c128_i32_18 = arith.constant 128 : i32
    %74 = arith.muli %c6_i32, %c128_i32_18 : i32
    %75 = tpu.assume_multiple %74, 128 : i32
    %c0_19 = arith.constant 0 : index
    %76 = arith.index_cast %1 : i32 to index
    %77 = arith.index_cast %75 : i32 to index
    %78 = vector.load %arg3[%c0_19, %76, %77] : memref<1x256x1024xf32, #tpu.memory_space<vmem>>, vector<1x128x128xf32>
    %79 = vector.shape_cast %78 : vector<1x128x128xf32> to vector<128x128xf32>
    %80 = tpu.transpose %79, [1, 0] : vector<128x128xf32> -> vector<128x128xf32>
    %c0_20 = arith.constant 0 : index
    %81 = arith.index_cast %75 : i32 to index
    %82 = arith.index_cast %1 : i32 to index
    %83 = vector.load %arg4[%c0_20, %81, %82] : memref<1x1024x256xf32, #tpu.memory_space<vmem>>, vector<1x128x128xf32>
    %84 = vector.shape_cast %83 : vector<1x128x128xf32> to vector<128x128xf32>
    %85 = vector.shape_cast %80 : vector<128x128xf32> to vector<1x128x128xf32>
    tpu.vector_store %arg4[%c0_20, %81, %82], %85 {strides = array<i32>} : memref<1x1024x256xf32, #tpu.memory_space<vmem>>, vector<1x128x128xf32>,
    %c7_i32 = arith.constant 7 : i32
    %c128_i32_21 = arith.constant 128 : i32
    %86 = arith.muli %c7_i32, %c128_i32_21 : i32
    %87 = tpu.assume_multiple %86, 128 : i32
    %c0_22 = arith.constant 0 : index
    %88 = arith.index_cast %1 : i32 to index
    %89 = arith.index_cast %87 : i32 to index
    %90 = vector.load %arg3[%c0_22, %88, %89] : memref<1x256x1024xf32, #tpu.memory_space<vmem>>, vector<1x128x128xf32>
    %91 = vector.shape_cast %90 : vector<1x128x128xf32> to vector<128x128xf32>
    %92 = tpu.transpose %91, [1, 0] : vector<128x128xf32> -> vector<128x128xf32>
    %c0_23 = arith.constant 0 : index
    %93 = arith.index_cast %87 : i32 to index
    %94 = arith.index_cast %1 : i32 to index
    %95 = vector.load %arg4[%c0_23, %93, %94] : memref<1x1024x256xf32, #tpu.memory_space<vmem>>, vector<1x128x128xf32>
    %96 = vector.shape_cast %95 : vector<1x128x128xf32> to vector<128x128xf32>
    %97 = vector.shape_cast %92 : vector<128x128xf32> to vector<1x128x128xf32>
    tpu.vector_store %arg4[%c0_23, %93, %94], %97 {strides = array<i32>} : memref<1x1024x256xf32, #tpu.memory_space<vmem>>, vector<1x128x128xf32>,
    %c8_i32 = arith.constant 8 : i32
    %c1_i32_24 = arith.constant 1 : i32
    %c128_i32_25 = arith.constant 128 : i32
    %98 = arith.muli %c1_i32_24, %c128_i32_25 : i32
    %99 = tpu.assume_multiple %98, 128 : i32
    %c0_i32_26 = arith.constant 0 : i32
    %c128_i32_27 = arith.constant 128 : i32
    %100 = arith.muli %c0_i32_26, %c128_i32_27 : i32
    %101 = tpu.assume_multiple %100, 128 : i32
    %c0_28 = arith.constant 0 : index
    %102 = arith.index_cast %99 : i32 to index
    %103 = arith.index_cast %101 : i32 to index
    %104 = vector.load %arg3[%c0_28, %102, %103] : memref<1x256x1024xf32, #tpu.memory_space<vmem>>, vector<1x128x128xf32>
    %105 = vector.shape_cast %104 : vector<1x128x128xf32> to vector<128x128xf32>
    %106 = tpu.transpose %105, [1, 0] : vector<128x128xf32> -> vector<128x128xf32>
    %c0_29 = arith.constant 0 : index
    %107 = arith.index_cast %101 : i32 to index
    %108 = arith.index_cast %99 : i32 to index
    %109 = vector.load %arg4[%c0_29, %107, %108] : memref<1x1024x256xf32, #tpu.memory_space<vmem>>, vector<1x128x128xf32>
    %110 = vector.shape_cast %109 : vector<1x128x128xf32> to vector<128x128xf32>
    %111 = vector.shape_cast %106 : vector<128x128xf32> to vector<1x128x128xf32>
    tpu.vector_store %arg4[%c0_29, %107, %108], %111 {strides = array<i32>} : memref<1x1024x256xf32, #tpu.memory_space<vmem>>, vector<1x128x128xf32>,
    %c1_i32_30 = arith.constant 1 : i32
    %c128_i32_31 = arith.constant 128 : i32
    %112 = arith.muli %c1_i32_30, %c128_i32_31 : i32
    %113 = tpu.assume_multiple %112, 128 : i32
    %c0_32 = arith.constant 0 : index
    %114 = arith.index_cast %99 : i32 to index
    %115 = arith.index_cast %113 : i32 to index
    %116 = vector.load %arg3[%c0_32, %114, %115] : memref<1x256x1024xf32, #tpu.memory_space<vmem>>, vector<1x128x128xf32>
    %117 = vector.shape_cast %116 : vector<1x128x128xf32> to vector<128x128xf32>
    %118 = tpu.transpose %117, [1, 0] : vector<128x128xf32> -> vector<128x128xf32>
    %c0_33 = arith.constant 0 : index
    %119 = arith.index_cast %113 : i32 to index
    %120 = arith.index_cast %99 : i32 to index
    %121 = vector.load %arg4[%c0_33, %119, %120] : memref<1x1024x256xf32, #tpu.memory_space<vmem>>, vector<1x128x128xf32>
    %122 = vector.shape_cast %121 : vector<1x128x128xf32> to vector<128x128xf32>
    %123 = vector.shape_cast %118 : vector<128x128xf32> to vector<1x128x128xf32>
    tpu.vector_store %arg4[%c0_33, %119, %120], %123 {strides = array<i32>} : memref<1x1024x256xf32, #tpu.memory_space<vmem>>, vector<1x128x128xf32>,
    %c2_i32_34 = arith.constant 2 : i32
    %c128_i32_35 = arith.constant 128 : i32
    %124 = arith.muli %c2_i32_34, %c128_i32_35 : i32
    %125 = tpu.assume_multiple %124, 128 : i32
    %c0_36 = arith.constant 0 : index
    %126 = arith.index_cast %99 : i32 to index
    %127 = arith.index_cast %125 : i32 to index
    %128 = vector.load %arg3[%c0_36, %126, %127] : memref<1x256x1024xf32, #tpu.memory_space<vmem>>, vector<1x128x128xf32>
    %129 = vector.shape_cast %128 : vector<1x128x128xf32> to vector<128x128xf32>
    %130 = tpu.transpose %129, [1, 0] : vector<128x128xf32> -> vector<128x128xf32>
    %c0_37 = arith.constant 0 : index
    %131 = arith.index_cast %125 : i32 to index
    %132 = arith.index_cast %99 : i32 to index
    %133 = vector.load %arg4[%c0_37, %131, %132] : memref<1x1024x256xf32, #tpu.memory_space<vmem>>, vector<1x128x128xf32>
    %134 = vector.shape_cast %133 : vector<1x128x128xf32> to vector<128x128xf32>
    %135 = vector.shape_cast %130 : vector<128x128xf32> to vector<1x128x128xf32>
    tpu.vector_store %arg4[%c0_37, %131, %132], %135 {strides = array<i32>} : memref<1x1024x256xf32, #tpu.memory_space<vmem>>, vector<1x128x128xf32>,
    %c3_i32_38 = arith.constant 3 : i32
    %c128_i32_39 = arith.constant 128 : i32
    %136 = arith.muli %c3_i32_38, %c128_i32_39 : i32
    %137 = tpu.assume_multiple %136, 128 : i32
    %c0_40 = arith.constant 0 : index
    %138 = arith.index_cast %99 : i32 to index
    %139 = arith.index_cast %137 : i32 to index
    %140 = vector.load %arg3[%c0_40, %138, %139] : memref<1x256x1024xf32, #tpu.memory_space<vmem>>, vector<1x128x128xf32>
    %141 = vector.shape_cast %140 : vector<1x128x128xf32> to vector<128x128xf32>
    %142 = tpu.transpose %141, [1, 0] : vector<128x128xf32> -> vector<128x128xf32>
    %c0_41 = arith.constant 0 : index
    %143 = arith.index_cast %137 : i32 to index
    %144 = arith.index_cast %99 : i32 to index
    %145 = vector.load %arg4[%c0_41, %143, %144] : memref<1x1024x256xf32, #tpu.memory_space<vmem>>, vector<1x128x128xf32>
    %146 = vector.shape_cast %145 : vector<1x128x128xf32> to vector<128x128xf32>
    %147 = vector.shape_cast %142 : vector<128x128xf32> to vector<1x128x128xf32>
    tpu.vector_store %arg4[%c0_41, %143, %144], %147 {strides = array<i32>} : memref<1x1024x256xf32, #tpu.memory_space<vmem>>, vector<1x128x128xf32>,
    %c4_i32_42 = arith.constant 4 : i32
    %c128_i32_43 = arith.constant 128 : i32
    %148 = arith.muli %c4_i32_42, %c128_i32_43 : i32
    %149 = tpu.assume_multiple %148, 128 : i32
    %c0_44 = arith.constant 0 : index
    %150 = arith.index_cast %99 : i32 to index
    %151 = arith.index_cast %149 : i32 to index
    %152 = vector.load %arg3[%c0_44, %150, %151] : memref<1x256x1024xf32, #tpu.memory_space<vmem>>, vector<1x128x128xf32>
    %153 = vector.shape_cast %152 : vector<1x128x128xf32> to vector<128x128xf32>
    %154 = tpu.transpose %153, [1, 0] : vector<128x128xf32> -> vector<128x128xf32>
    %c0_45 = arith.constant 0 : index
    %155 = arith.index_cast %149 : i32 to index
    %156 = arith.index_cast %99 : i32 to index
    %157 = vector.load %arg4[%c0_45, %155, %156] : memref<1x1024x256xf32, #tpu.memory_space<vmem>>, vector<1x128x128xf32>
    %158 = vector.shape_cast %157 : vector<1x128x128xf32> to vector<128x128xf32>
    %159 = vector.shape_cast %154 : vector<128x128xf32> to vector<1x128x128xf32>
    tpu.vector_store %arg4[%c0_45, %155, %156], %159 {strides = array<i32>} : memref<1x1024x256xf32, #tpu.memory_space<vmem>>, vector<1x128x128xf32>,
    %c5_i32_46 = arith.constant 5 : i32
    %c128_i32_47 = arith.constant 128 : i32
    %160 = arith.muli %c5_i32_46, %c128_i32_47 : i32
    %161 = tpu.assume_multiple %160, 128 : i32
    %c0_48 = arith.constant 0 : index
    %162 = arith.index_cast %99 : i32 to index
    %163 = arith.index_cast %161 : i32 to index
    %164 = vector.load %arg3[%c0_48, %162, %163] : memref<1x256x1024xf32, #tpu.memory_space<vmem>>, vector<1x128x128xf32>
    %165 = vector.shape_cast %164 : vector<1x128x128xf32> to vector<128x128xf32>
    %166 = tpu.transpose %165, [1, 0] : vector<128x128xf32> -> vector<128x128xf32>
    %c0_49 = arith.constant 0 : index
    %167 = arith.index_cast %161 : i32 to index
    %168 = arith.index_cast %99 : i32 to index
    %169 = vector.load %arg4[%c0_49, %167, %168] : memref<1x1024x256xf32, #tpu.memory_space<vmem>>, vector<1x128x128xf32>
    %170 = vector.shape_cast %169 : vector<1x128x128xf32> to vector<128x128xf32>
    %171 = vector.shape_cast %166 : vector<128x128xf32> to vector<1x128x128xf32>
    tpu.vector_store %arg4[%c0_49, %167, %168], %171 {strides = array<i32>} : memref<1x1024x256xf32, #tpu.memory_space<vmem>>, vector<1x128x128xf32>,
    %c6_i32_50 = arith.constant 6 : i32
    %c128_i32_51 = arith.constant 128 : i32
    %172 = arith.muli %c6_i32_50, %c128_i32_51 : i32
    %173 = tpu.assume_multiple %172, 128 : i32
    %c0_52 = arith.constant 0 : index
    %174 = arith.index_cast %99 : i32 to index
    %175 = arith.index_cast %173 : i32 to index
    %176 = vector.load %arg3[%c0_52, %174, %175] : memref<1x256x1024xf32, #tpu.memory_space<vmem>>, vector<1x128x128xf32>
    %177 = vector.shape_cast %176 : vector<1x128x128xf32> to vector<128x128xf32>
    %178 = tpu.transpose %177, [1, 0] : vector<128x128xf32> -> vector<128x128xf32>
    %c0_53 = arith.constant 0 : index
    %179 = arith.index_cast %173 : i32 to index
    %180 = arith.index_cast %99 : i32 to index
    %181 = vector.load %arg4[%c0_53, %179, %180] : memref<1x1024x256xf32, #tpu.memory_space<vmem>>, vector<1x128x128xf32>
    %182 = vector.shape_cast %181 : vector<1x128x128xf32> to vector<128x128xf32>
    %183 = vector.shape_cast %178 : vector<128x128xf32> to vector<1x128x128xf32>
    tpu.vector_store %arg4[%c0_53, %179, %180], %183 {strides = array<i32>} : memref<1x1024x256xf32, #tpu.memory_space<vmem>>, vector<1x128x128xf32>,
    %c7_i32_54 = arith.constant 7 : i32
    %c128_i32_55 = arith.constant 128 : i32
    %184 = arith.muli %c7_i32_54, %c128_i32_55 : i32
    %185 = tpu.assume_multiple %184, 128 : i32
    %c0_56 = arith.constant 0 : index
    %186 = arith.index_cast %99 : i32 to index
    %187 = arith.index_cast %185 : i32 to index
    %188 = vector.load %arg3[%c0_56, %186, %187] : memref<1x256x1024xf32, #tpu.memory_space<vmem>>, vector<1x128x128xf32>
    %189 = vector.shape_cast %188 : vector<1x128x128xf32> to vector<128x128xf32>
    %190 = tpu.transpose %189, [1, 0] : vector<128x128xf32> -> vector<128x128xf32>
    %c0_57 = arith.constant 0 : index
    %191 = arith.index_cast %185 : i32 to index
    %192 = arith.index_cast %99 : i32 to index
    %193 = vector.load %arg4[%c0_57, %191, %192] : memref<1x1024x256xf32, #tpu.memory_space<vmem>>, vector<1x128x128xf32>
    %194 = vector.shape_cast %193 : vector<1x128x128xf32> to vector<128x128xf32>
    %195 = vector.shape_cast %190 : vector<128x128xf32> to vector<1x128x128xf32>
    tpu.vector_store %arg4[%c0_57, %191, %192], %195 {strides = array<i32>} : memref<1x1024x256xf32, #tpu.memory_space<vmem>>, vector<1x128x128xf32>,
    %c8_i32_58 = arith.constant 8 : i32
    %c2_i32_59 = arith.constant 2 : i32
    return
  }
  func.func @transform_0(%arg0: i32, %arg1: i32, %arg2: i32) -> (i32, i32, i32) {
    %c0_i32 = arith.constant 0 : i32
    return %arg0, %arg1, %arg2 : i32, i32, i32
  }
  func.func @transform_1(%arg0: i32, %arg1: i32, %arg2: i32) -> (i32, i32, i32) {
    %c0_i32 = arith.constant 0 : i32
    return %arg0, %arg2, %arg1 : i32, i32, i32
  }
}

</mosaic_0001>

<llo_original>
// kernel: _transpose_1_2_pallas.1
$region0: #{_transpose_1_2_pallas.1}
  #allocation0 [shape = 'u32[]', space=smem, size = 0x4, offset = 0x4, fixed_abs, tag = 'smem constant byte address 0x4 - core index']
  #allocation1 [shape = 'u32[72,128]{1,0:T(1,128)}', space=vmem, size = 0x9000, scoped, tag = 'internal scratch']
  %s0 = inlined_call_operand.hbm [shape: f32[2,256,1024], index: 0, kind: input, shape index: {}]
  %s1 = inlined_call_operand.hbm [shape: f32[2,1024,256], index: 1, kind: output, shape index: {}]
  %s2 = sld [smem:[#allocation0]]
  $region41: #{_transpose_1_2_pallas.1} parent=0
    _
  %s4 = ssub.s32 1, %s2
  %s5 = scalar_select 0, %s4, %s2
  $region1: #{_transpose_1_2_pallas.1} parent=0
    #allocation2 [shape = 'u8[2097152]{0}', space=vmem, size = 0x200000, scoped, tag = 'input window, operand 0']
    #allocation3 [shape = 's32[2]{0}', space=sflag, size = 0x8, scoped, tag = 'scoped memory for _transpose_1_2_pallas.1']
    #allocation4 [shape = 's32[2]{0}', space=sflag, size = 0x8, scoped, tag = 'scoped memory for _transpose_1_2_pallas.1']
    #allocation5 [shape = 'u8[2097152]{0}', space=vmem, size = 0x200000, scoped, tag = 'output window, operand 0']
    %6 = vsyncpa [#allocation3], 0
    %s7 = scalar_lea.sflag [#allocation3], 1
    %8 = vsyncpa %s7, 0
    %9 = vsyncpa [#allocation4], 0
    %s10 = scalar_lea.sflag [#allocation4], 1
    %11 = vsyncpa %s10, 0
    loop: start=0, step=1, limit=4
    $region2: #{_transpose_1_2_pallas.1} parent=1 // loop_pre_header
      _
    $region3: #{_transpose_1_2_pallas.1} parent=1 // loop_header
      %s13 = sphi 0, %s17
      %p14 = scmp.ge.s32.totalorder %s13, 4
      %s20 = sphi 0, %s39
      %s21 = sphi 0, %s35
      %s22 = sphi 0, %s31
      %s23 = sphi 0, %s20
      %s24 = sphi 0, %s21
      %s25 = sphi 0, %s22
      %s26 = sphi 0, %s23
      %s27 = sphi 0, %s24
      %s28 = sphi 0, %s25
      %s46 = sphi 0, %s48
      %s49 = sphi 0, %s46
      %s50 = sphi 0, %s49
      %s66 = sphi 0, %s50
      %s76 = sphi 0, %s78
      %s79 = sphi 0, %s76
      %s80 = sphi 0, %s79
      %s96 = sphi 0, %s80
    $region4: #{_transpose_1_2_pallas.1} parent=1 // loop_header_branch
      %16 = sbr.rel (%p14) target = $region8
    $region5: #{_transpose_1_2_pallas.1} parent=1 // loop_body
      %s18 = ssub.s32 %s13, 1
      %s19 = ssub.s32 %s13, 2
      %s29 = sadd.s32 1, %s22
      %p30 = scmp.ge.s32.totalorder %s29, 1
      %s31 = scalar_select %p30, 0, %s29
      %s32 = sadd.s32 1, %s21
      %s33 = scalar_select %p30, %s32, %s21
      %p34 = scmp.ge.s32.totalorder %s33, 1
      %s35 = scalar_select %p34, 0, %s33
      %s36 = sadd.s32 1, %s20
      %s37 = scalar_select %p34, %s36, %s20
      %p38 = scmp.ge.s32.totalorder %s37, 2
      %s39 = scalar_select %p38, 0, %s37
      %s40 = ssub.s32 %s20, %s39
      %s41 = ssub.s32 %s21, %s35
      %s42 = sor.u32 %s40, %s41
      %s43 = ssub.s32 %s22, %s31
      %s44 = sor.u32 %s42, %s43
      %p45 = scmp.eq.s32.totalorder %s44, 0
      %s47 = sadd.s32 %s46, 1
      %s48 = scalar_select %p45, %s46, %s47
      %p51 = pneg %p45
      %p52 = scmp.eq.s32.totalorder %s13, 1
      %p53 = por %p51, %p52
      %p54 = scmp.ne.s32.totalorder %s46, %s49
      %p55 = scmp.eq.s32.totalorder %s13, 0
      %p56 = por %p54, %p55
      %p57 = scmp.ne.s32.totalorder %s46, %s49
      %p58 = scmp.eq.s32.totalorder %s18, 1
      %p59 = por %p57, %p58
      %p60 = scmp.ne.s32.totalorder %s49, %s50
      %p61 = scmp.eq.s32.totalorder %s18, 0
      %p62 = por %p60, %p61
      %p63 = scmp.ne.s32.totalorder %s49, %s50
      %p64 = scmp.eq.s32.totalorder %s19, 1
      %p65 = por %p63, %p64
      %p67 = scmp.ne.s32.totalorder %s50, %s66
      %p68 = scmp.eq.s32.totalorder %s19, 0
      %p69 = por %p67, %p68
      %s70 = ssub.s32 %s20, %s39
      %s71 = ssub.s32 %s22, %s31
      %s72 = sor.u32 %s70, %s71
      %s73 = ssub.s32 %s21, %s35
      %s74 = sor.u32 %s72, %s73
      %p75 = scmp.eq.s32.totalorder %s74, 0
      %s77 = sadd.s32 %s76, 1
      %s78 = scalar_select %p75, %s76, %s77
      %p81 = pneg %p75
      %p82 = scmp.eq.s32.totalorder %s13, 1
      %p83 = por %p81, %p82
      %p84 = scmp.ne.s32.totalorder %s76, %s79
      %p85 = scmp.eq.s32.totalorder %s13, 0
      %p86 = por %p84, %p85
      %p87 = scmp.ne.s32.totalorder %s76, %s79
      %p88 = scmp.eq.s32.totalorder %s18, 1
      %p89 = por %p87, %p88
      %p90 = scmp.ne.s32.totalorder %s79, %s80
      %p91 = scmp.eq.s32.totalorder %s18, 0
      %p92 = por %p90, %p91
      %p93 = scmp.ne.s32.totalorder %s79, %s80
      %p94 = scmp.eq.s32.totalorder %s19, 1
      %p95 = por %p93, %p94
      %p97 = scmp.ne.s32.totalorder %s80, %s96
      %p98 = scmp.eq.s32.totalorder %s19, 0
      %p99 = por %p97, %p98
      %p100 = scmp.le.s32.totalorder 1, %s13
      %p101 = scmp.lt.s32.totalorder %s13, 3
      %p102 = pnand %p100, %p101
      %p103 = pneg %p102
      // Predicated region
      $region9: #{_transpose_1_2_pallas.1} parent=5 // pred_check
        _
      $region10: #{_transpose_1_2_pallas.1} parent=5 // pred_check_branch
        %105 = sbr.rel (%p102) target = $region12
      $region11: #{_transpose_1_2_pallas.1} parent=5 // pred_region
        %s106 = ssub.s32 %s13, 1
      $region12: #{_transpose_1_2_pallas.1} parent=5 // pred_fallthru
        _
      %p107 = scmp.lt.s32.totalorder %s13, 2
      // Predicated region
      $region13: #{_transpose_1_2_pallas.1} parent=5 // pred_check
        %p108 = pneg %p107
      $region14: #{_transpose_1_2_pallas.1} parent=5 // pred_check_branch
        %110 = sbr.rel (%p108) target = $region16
      $region15: #{_transpose_1_2_pallas.1} parent=5 // pred_region
        // Predicated region
        $region17: #{_transpose_1_2_pallas.1} parent=15 // pred_check
          %p111 = pneg %p56
        $region18: #{_transpose_1_2_pallas.1} parent=15 // pred_check_branch
          %113 = sbr.rel (%p111) target = $region20
        $region19: #{_transpose_1_2_pallas.1} parent=15 // pred_region
          %s114 = sand.u32 %s46, 1
          %s115 = scalar_lea.sflag [#allocation3], %s114
          %s116 = sand.u32 %s46, 1
          %s117 = smul.addr %s116, 2048
          %s118 = scalar_lea.vmem [#allocation2], %s117
          %s119 = smul.u32 32, %s21
          %s120 = smul.u32 8, %s22
          %122 = vsyncadd %s115, 0
          %s123 = smul.addr %s119, 8
          %s124 = sadd.s32 %s120, %s123
          %s125 = smul.addr %s20, 256
          %s126 = sadd.s32 %s124, %s125
          %s127 = smul.addr %s126, 8
          %s128 = scalar_lea.hbm %s0, %s127
          %s129 = sshll.u32 %s128, 4
          %s130 = int_to_ptr.hbm [resolvable:$true] %s129
          %s131 = sshll.u32 %s118, 4
          %s132 = int_to_ptr.vmem [resolvable:$true] %s131
          %137 = dma.hbm_to_vmem [thread:$0]  %s130, 32768, %s132, %s115, 1024, 1024, 64
        $region20: #{_transpose_1_2_pallas.1} parent=15 // pred_fallthru
          _
      $region16: #{_transpose_1_2_pallas.1} parent=5 // pred_fallthru
        _
      %p138 = scmp.le.s32.totalorder 1, %s13
      %p139 = scmp.lt.s32.totalorder %s13, 3
      %p140 = pnand %p138, %p139
      %p141 = pneg %p140
      // Predicated region
      $region21: #{_transpose_1_2_pallas.1} parent=5 // pred_check
        _
      $region22: #{_transpose_1_2_pallas.1} parent=5 // pred_check_branch
        %143 = sbr.rel (%p140) target = $region24
      $region23: #{_transpose_1_2_pallas.1} parent=5 // pred_region
        %s144 = ssub.s32 %s13, 1
        %s145 = sand.u32 %s49, 1
        %s146 = scalar_lea.sflag [#allocation3], %s145
        %s147 = sand.u32 %s49, 1
        %s148 = smul.addr %s147, 2048
        %s149 = scalar_lea.vmem [#allocation2], %s148
        // Predicated region
        $region25: #{_transpose_1_2_pallas.1} parent=23 // pred_check
          %p150 = pneg %p62
        $region26: #{_transpose_1_2_pallas.1} parent=23 // pred_check_branch
          %152 = sbr.rel (%p150) target = $region28
        $region27: #{_transpose_1_2_pallas.1} parent=23 // pred_region
          %154 = dma.done %s146, 32768
        $region28: #{_transpose_1_2_pallas.1} parent=23 // pred_fallthru
          _
        %s155 = sand.u32 %s49, 1
        %s156 = scalar_lea.sflag [#allocation3], %s155
        %s157 = sand.u32 %s49, 1
        %s158 = smul.addr %s157, 2048
        %s159 = scalar_lea.vmem [#allocation2], %s158
        %p160 = pneg %p62
        %p161 = pneg %p59
        %p162 = pneg %p92
        %p163 = pneg %p89
        %s164 = sand.u32 %s79, 1
        %s165 = scalar_lea.sflag [#allocation4], %s164
        %s166 = sand.u32 %s79, 1
        %s167 = smul.addr %s166, 2048
        %s168 = scalar_lea.vmem [#allocation5], %s167
        %s169 = smul.u32 32, %s24
        %s170 = smul.u32 8, %s25
        %s171 = smul.u32 128, %s25
        %s172 = smul.u32 2, %s24
        %s173 = smul.u32 0, 8
        %s174 = sadd.s32 0, %s173
        %s175 = smul.addr %s174, 8
        %s176 = scalar_lea.vmem %s149, %s175 [#allocation2]
        %v177 = vld [vmem:[%s176] sm:$0xff]
        %v178 = vld [vmem:[%s176 + $0x40] sm:$0xff]
        %v179 = vld [vmem:[%s176 + $0x80] sm:$0xff]
        %v180 = vld [vmem:[%s176 + $0xc0] sm:$0xff]
        %v181 = vld [vmem:[%s176 + $0x100] sm:$0xff]
        %v182 = vld [vmem:[%s176 + $0x140] sm:$0xff]
        %v183 = vld [vmem:[%s176 + $0x180] sm:$0xff]
        %v184 = vld [vmem:[%s176 + $0x1c0] sm:$0xff]
        %v185 = vld [vmem:[%s176 + $0x200] sm:$0xff]
        %v186 = vld [vmem:[%s176 + $0x240] sm:$0xff]
        %v187 = vld [vmem:[%s176 + $0x280] sm:$0xff]
        %v188 = vld [vmem:[%s176 + $0x2c0] sm:$0xff]
        %v189 = vld [vmem:[%s176 + $0x300] sm:$0xff]
        %v190 = vld [vmem:[%s176 + $0x340] sm:$0xff]
        %v191 = vld [vmem:[%s176 + $0x380] sm:$0xff]
        %v192 = vld [vmem:[%s176 + $0x3c0] sm:$0xff]
        %193 = vxpose.xlu0.b32.start [1/16] %v177, 128
        %194 = vxpose.xlu0.b32.cont [2/16] %v178, 128
        %195 = vxpose.xlu0.b32.cont [3/16] %v179, 128
        %196 = vxpose.xlu0.b32.cont [4/16] %v180, 128
        %197 = vxpose.xlu0.b32.cont [5/16] %v181, 128
        %198 = vxpose.xlu0.b32.cont [6/16] %v182, 128
        %199 = vxpose.xlu0.b32.cont [7/16] %v183, 128
        %200 = vxpose.xlu0.b32.cont [8/16] %v184, 128
        %201 = vxpose.xlu0.b32.cont [9/16] %v185, 128
        %202 = vxpose.xlu0.b32.cont [10/16] %v186, 128
        %203 = vxpose.xlu0.b32.cont [11/16] %v187, 128
        %204 = vxpose.xlu0.b32.cont [12/16] %v188, 128
        %205 = vxpose.xlu0.b32.cont [13/16] %v189, 128
        %206 = vxpose.xlu0.b32.cont [14/16] %v190, 128
        %207 = vxpose.xlu0.b32.cont [15/16] %v191, 128
        %208 = vxpose.xlu0.b32.end [16/16] %v192, 128
        %v209 = vpop.trf.xlu0
        %v210 = vpop.trf.xlu0
        %v211 = vpop.trf.xlu0
        %v212 = vpop.trf.xlu0
        %v213 = vpop.trf.xlu0
        %v214 = vpop.trf.xlu0
        %v215 = vpop.trf.xlu0
        %v216 = vpop.trf.xlu0
        %v217 = vpop.trf.xlu0
        %v218 = vpop.trf.xlu0
        %v219 = vpop.trf.xlu0
        %v220 = vpop.trf.xlu0
        %v221 = vpop.trf.xlu0
        %v222 = vpop.trf.xlu0
        %v223 = vpop.trf.xlu0
        %v224 = vpop.trf.xlu0
        %s225 = smul.u32 0, 2
        %s226 = sadd.s32 0, %s225
        %s227 = smul.addr %s226, 8
        %s228 = scalar_lea.vmem %s168, %s227 [#allocation5]
        %229 = vst [vmem:[%s228] sm:$0xff] %v209
        %230 = vst [vmem:[%s228 + $0x10] sm:$0xff] %v210
        %231 = vst [vmem:[%s228 + $0x20] sm:$0xff] %v211
        %232 = vst [vmem:[%s228 + $0x30] sm:$0xff] %v212
        %233 = vst [vmem:[%s228 + $0x40] sm:$0xff] %v213
        %234 = vst [vmem:[%s228 + $0x50] sm:$0xff] %v214
        %235 = vst [vmem:[%s228 + $0x60] sm:$0xff] %v215
        %236 = vst [vmem:[%s228 + $0x70] sm:$0xff] %v216
        %237 = vst [vmem:[%s228 + $0x80] sm:$0xff] %v217
        %238 = vst [vmem:[%s228 + $0x90] sm:$0xff] %v218
        %239 = vst [vmem:[%s228 + $0xa0] sm:$0xff] %v219
        %240 = vst [vmem:[%s228 + $0xb0] sm:$0xff] %v220
        %241 = vst [vmem:[%s228 + $0xc0] sm:$0xff] %v221
        %242 = vst [vmem:[%s228 + $0xd0] sm:$0xff] %v222
        %243 = vst [vmem:[%s228 + $0xe0] sm:$0xff] %v223
        %244 = vst [vmem:[%s228 + $0xf0] sm:$0xff] %v224
        %s245 = sadd.s32 1, %s173
        %s246 = smul.addr %s245, 8
        %s247 = scalar_lea.vmem %s149, %s246 [#allocation2]
        %v248 = vld [vmem:[%s247] sm:$0xff]
        %v249 = vld [vmem:[%s247 + $0x40] sm:$0xff]
        %v250 = vld [vmem:[%s247 + $0x80] sm:$0xff]
        %v251 = vld [vmem:[%s247 + $0xc0] sm:$0xff]
        %v252 = vld [vmem:[%s247 + $0x100] sm:$0xff]
        %v253 = vld [vmem:[%s247 + $0x140] sm:$0xff]
        %v254 = vld [vmem:[%s247 + $0x180] sm:$0xff]
        %v255 = vld [vmem:[%s247 + $0x1c0] sm:$0xff]
        %v256 = vld [vmem:[%s247 + $0x200] sm:$0xff]
        %v257 = vld [vmem:[%s247 + $0x240] sm:$0xff]
        %v258 = vld [vmem:[%s247 + $0x280] sm:$0xff]
        %v259 = vld [vmem:[%s247 + $0x2c0] sm:$0xff]
        %v260 = vld [vmem:[%s247 + $0x300] sm:$0xff]
        %v261 = vld [vmem:[%s247 + $0x340] sm:$0xff]
        %v262 = vld [vmem:[%s247 + $0x380] sm:$0xff]
        %v263 = vld [vmem:[%s247 + $0x3c0] sm:$0xff]
        %264 = vxpose.xlu0.b32.start [1/16] %v248, 128
        %265 = vxpose.xlu0.b32.cont [2/16] %v249, 128
        %266 = vxpose.xlu0.b32.cont [3/16] %v250, 128
        %267 = vxpose.xlu0.b32.cont [4/16] %v251, 128
        %268 = vxpose.xlu0.b32.cont [5/16] %v252, 128
        %269 = vxpose.xlu0.b32.cont [6/16] %v253, 128
        %270 = vxpose.xlu0.b32.cont [7/16] %v254, 128
        %271 = vxpose.xlu0.b32.cont [8/16] %v255, 128
        %272 = vxpose.xlu0.b32.cont [9/16] %v256, 128
        %273 = vxpose.xlu0.b32.cont [10/16] %v257, 128
        %274 = vxpose.xlu0.b32.cont [11/16] %v258, 128
        %275 = vxpose.xlu0.b32.cont [12/16] %v259, 128
        %276 = vxpose.xlu0.b32.cont [13/16] %v260, 128
        %277 = vxpose.xlu0.b32.cont [14/16] %v261, 128
        %278 = vxpose.xlu0.b32.cont [15/16] %v262, 128
        %279 = vxpose.xlu0.b32.end [16/16] %v263, 128
        %v280 = vpop.trf.xlu0
        %v281 = vpop.trf.xlu0
        %v282 = vpop.trf.xlu0
        %v283 = vpop.trf.xlu0
        %v284 = vpop.trf.xlu0
        %v285 = vpop.trf.xlu0
        %v286 = vpop.trf.xlu0
        %v287 = vpop.trf.xlu0
        %v288 = vpop.trf.xlu0
        %v289 = vpop.trf.xlu0
        %v290 = vpop.trf.xlu0
        %v291 = vpop.trf.xlu0
        %v292 = vpop.trf.xlu0
        %v293 = vpop.trf.xlu0
        %v294 = vpop.trf.xlu0
        %v295 = vpop.trf.xlu0
        %s296 = smul.u32 16, 2
        %s297 = sadd.s32 0, %s296
        %s298 = smul.addr %s297, 8
        %s299 = scalar_lea.vmem %s168, %s298 [#allocation5]
        %300 = vst [vmem:[%s299] sm:$0xff] %v280
        %301 = vst [vmem:[%s299 + $0x10] sm:$0xff] %v281
        %302 = vst [vmem:[%s299 + $0x20] sm:$0xff] %v282
        %303 = vst [vmem:[%s299 + $0x30] sm:$0xff] %v283
        %304 = vst [vmem:[%s299 + $0x40] sm:$0xff] %v284
        %305 = vst [vmem:[%s299 + $0x50] sm:$0xff] %v285
        %306 = vst [vmem:[%s299 + $0x60] sm:$0xff] %v286
        %307 = vst [vmem:[%s299 + $0x70] sm:$0xff] %v287
        %308 = vst [vmem:[%s299 + $0x80] sm:$0xff] %v288
        %309 = vst [vmem:[%s299 + $0x90] sm:$0xff] %v289
        %310 = vst [vmem:[%s299 + $0xa0] sm:$0xff] %v290
        %311 = vst [vmem:[%s299 + $0xb0] sm:$0xff] %v291
        %312 = vst [vmem:[%s299 + $0xc0] sm:$0xff] %v292
        %313 = vst [vmem:[%s299 + $0xd0] sm:$0xff] %v293
        %314 = vst [vmem:[%s299 + $0xe0] sm:$0xff] %v294
        %315 = vst [vmem:[%s299 + $0xf0] sm:$0xff] %v295
        %s316 = sadd.s32 2, %s173
        %s317 = smul.addr %s316, 8
        %s318 = scalar_lea.vmem %s149, %s317 [#allocation2]
        %v319 = vld [vmem:[%s318] sm:$0xff]
        %v320 = vld [vmem:[%s318 + $0x40] sm:$0xff]
        %v321 = vld [vmem:[%s318 + $0x80] sm:$0xff]
        %v322 = vld [vmem:[%s318 + $0xc0] sm:$0xff]
        %v323 = vld [vmem:[%s318 + $0x100] sm:$0xff]
        %v324 = vld [vmem:[%s318 + $0x140] sm:$0xff]
        %v325 = vld [vmem:[%s318 + $0x180] sm:$0xff]
        %v326 = vld [vmem:[%s318 + $0x1c0] sm:$0xff]
        %v327 = vld [vmem:[%s318 + $0x200] sm:$0xff]
        %v328 = vld [vmem:[%s318 + $0x240] sm:$0xff]
        %v329 = vld [vmem:[%s318 + $0x280] sm:$0xff]
        %v330 = vld [vmem:[%s318 + $0x2c0] sm:$0xff]
        %v331 = vld [vmem:[%s318 + $0x300] sm:$0xff]
        %v332 = vld [vmem:[%s318 + $0x340] sm:$0xff]
        %v333 = vld [vmem:[%s318 + $0x380] sm:$0xff]
        %v334 = vld [vmem:[%s318 + $0x3c0] sm:$0xff]
        %335 = vxpose.xlu0.b32.start [1/16] %v319, 128
        %336 = vxpose.xlu0.b32.cont [2/16] %v320, 128
        %337 = vxpose.xlu0.b32.cont [3/16] %v321, 128
        %338 = vxpose.xlu0.b32.cont [4/16] %v322, 128
        %339 = vxpose.xlu0.b32.cont [5/16] %v323, 128
        %340 = vxpose.xlu0.b32.cont [6/16] %v324, 128
        %341 = vxpose.xlu0.b32.cont [7/16] %v325, 128
        %342 = vxpose.xlu0.b32.cont [8/16] %v326, 128
        %343 = vxpose.xlu0.b32.cont [9/16] %v327, 128
        %344 = vxpose.xlu0.b32.cont [10/16] %v328, 128
        %345 = vxpose.xlu0.b32.cont [11/16] %v329, 128
        %346 = vxpose.xlu0.b32.cont [12/16] %v330, 128
        %347 = vxpose.xlu0.b32.cont [13/16] %v331, 128
        %348 = vxpose.xlu0.b32.cont [14/16] %v332, 128
        %349 = vxpose.xlu0.b32.cont [15/16] %v333, 128
        %350 = vxpose.xlu0.b32.end [16/16] %v334, 128
        %v351 = vpop.trf.xlu0
        %v352 = vpop.trf.xlu0
        %v353 = vpop.trf.xlu0
        %v354 = vpop.trf.xlu0
        %v355 = vpop.trf.xlu0
        %v356 = vpop.trf.xlu0
        %v357 = vpop.trf.xlu0
        %v358 = vpop.trf.xlu0
        %v359 = vpop.trf.xlu0
        %v360 = vpop.trf.xlu0
        %v361 = vpop.trf.xlu0
        %v362 = vpop.trf.xlu0
        %v363 = vpop.trf.xlu0
        %v364 = vpop.trf.xlu0
        %v365 = vpop.trf.xlu0
        %v366 = vpop.trf.xlu0
        %s367 = smul.u32 32, 2
        %s368 = sadd.s32 0, %s367
        %s369 = smul.addr %s368, 8
        %s370 = scalar_lea.vmem %s168, %s369 [#allocation5]
        %371 = vst [vmem:[%s370] sm:$0xff] %v351
        %372 = vst [vmem:[%s370 + $0x10] sm:$0xff] %v352
        %373 = vst [vmem:[%s370 + $0x20] sm:$0xff] %v353
        %374 = vst [vmem:[%s370 + $0x30] sm:$0xff] %v354
        %375 = vst [vmem:[%s370 + $0x40] sm:$0xff] %v355
        %376 = vst [vmem:[%s370 + $0x50] sm:$0xff] %v356
        %377 = vst [vmem:[%s370 + $0x60] sm:$0xff] %v357
        %378 = vst [vmem:[%s370 + $0x70] sm:$0xff] %v358
        %379 = vst [vmem:[%s370 + $0x80] sm:$0xff] %v359
        %380 = vst [vmem:[%s370 + $0x90] sm:$0xff] %v360
        %381 = vst [vmem:[%s370 + $0xa0] sm:$0xff] %v361
        %382 = vst [vmem:[%s370 + $0xb0] sm:$0xff] %v362
        %383 = vst [vmem:[%s370 + $0xc0] sm:$0xff] %v363
        %384 = vst [vmem:[%s370 + $0xd0] sm:$0xff] %v364
        %385 = vst [vmem:[%s370 + $0xe0] sm:$0xff] %v365
        %386 = vst [vmem:[%s370 + $0xf0] sm:$0xff] %v366
        %s387 = sadd.s32 3, %s173
        %s388 = smul.addr %s387, 8
        %s389 = scalar_lea.vmem %s149, %s388 [#allocation2]
        %v390 = vld [vmem:[%s389] sm:$0xff]
        %v391 = vld [vmem:[%s389 + $0x40] sm:$0xff]
        %v392 = vld [vmem:[%s389 + $0x80] sm:$0xff]
        %v393 = vld [vmem:[%s389 + $0xc0] sm:$0xff]
        %v394 = vld [vmem:[%s389 + $0x100] sm:$0xff]
        %v395 = vld [vmem:[%s389 + $0x140] sm:$0xff]
        %v396 = vld [vmem:[%s389 + $0x180] sm:$0xff]
        %v397 = vld [vmem:[%s389 + $0x1c0] sm:$0xff]
        %v398 = vld [vmem:[%s389 + $0x200] sm:$0xff]
        %v399 = vld [vmem:[%s389 + $0x240] sm:$0xff]
        %v400 = vld [vmem:[%s389 + $0x280] sm:$0xff]
        %v401 = vld [vmem:[%s389 + $0x2c0] sm:$0xff]
        %v402 = vld [vmem:[%s389 + $0x300] sm:$0xff]
        %v403 = vld [vmem:[%s389 + $0x340] sm:$0xff]
        %v404 = vld [vmem:[%s389 + $0x380] sm:$0xff]
        %v405 = vld [vmem:[%s389 + $0x3c0] sm:$0xff]
        %406 = vxpose.xlu0.b32.start [1/16] %v390, 128
        %407 = vxpose.xlu0.b32.cont [2/16] %v391, 128
        %408 = vxpose.xlu0.b32.cont [3/16] %v392, 128
        %409 = vxpose.xlu0.b32.cont [4/16] %v393, 128
        %410 = vxpose.xlu0.b32.cont [5/16] %v394, 128
        %411 = vxpose.xlu0.b32.cont [6/16] %v395, 128
        %412 = vxpose.xlu0.b32.cont [7/16] %v396, 128
        %413 = vxpose.xlu0.b32.cont [8/16] %v397, 128
        %414 = vxpose.xlu0.b32.cont [9/16] %v398, 128
        %415 = vxpose.xlu0.b32.cont [10/16] %v399, 128
        %416 = vxpose.xlu0.b32.cont [11/16] %v400, 128
        %417 = vxpose.xlu0.b32.cont [12/16] %v401, 128
        %418 = vxpose.xlu0.b32.cont [13/16] %v402, 128
        %419 = vxpose.xlu0.b32.cont [14/16] %v403, 128
        %420 = vxpose.xlu0.b32.cont [15/16] %v404, 128
        %421 = vxpose.xlu0.b32.end [16/16] %v405, 128
        %v422 = vpop.trf.xlu0
        %v423 = vpop.trf.xlu0
        %v424 = vpop.trf.xlu0
        %v425 = vpop.trf.xlu0
        %v426 = vpop.trf.xlu0
        %v427 = vpop.trf.xlu0
        %v428 = vpop.trf.xlu0
        %v429 = vpop.trf.xlu0
        %v430 = vpop.trf.xlu0
        %v431 = vpop.trf.xlu0
        %v432 = vpop.trf.xlu0
        %v433 = vpop.trf.xlu0
        %v434 = vpop.trf.xlu0
        %v435 = vpop.trf.xlu0
        %v436 = vpop.trf.xlu0
        %v437 = vpop.trf.xlu0
        %s438 = smul.u32 48, 2
        %s439 = sadd.s32 0, %s438
        %s440 = smul.addr %s439, 8
        %s441 = scalar_lea.vmem %s168, %s440 [#allocation5]
        %442 = vst [vmem:[%s441] sm:$0xff] %v422
        %443 = vst [vmem:[%s441 + $0x10] sm:$0xff] %v423
        %444 = vst [vmem:[%s441 + $0x20] sm:$0xff] %v424
        %445 = vst [vmem:[%s441 + $0x30] sm:$0xff] %v425
        %446 = vst [vmem:[%s441 + $0x40] sm:$0xff] %v426
        %447 = vst [vmem:[%s441 + $0x50] sm:$0xff] %v427
        %448 = vst [vmem:[%s441 + $0x60] sm:$0xff] %v428
        %449 = vst [vmem:[%s441 + $0x70] sm:$0xff] %v429
        %450 = vst [vmem:[%s441 + $0x80] sm:$0xff] %v430
        %451 = vst [vmem:[%s441 + $0x90] sm:$0xff] %v431
        %452 = vst [vmem:[%s441 + $0xa0] sm:$0xff] %v432
        %453 = vst [vmem:[%s441 + $0xb0] sm:$0xff] %v433
        %454 = vst [vmem:[%s441 + $0xc0] sm:$0xff] %v434
        %455 = vst [vmem:[%s441 + $0xd0] sm:$0xff] %v435
        %456 = vst [vmem:[%s441 + $0xe0] sm:$0xff] %v436
        %457 = vst [vmem:[%s441 + $0xf0] sm:$0xff] %v437
        %s458 = sadd.s32 4, %s173
        %s459 = smul.addr %s458, 8
        %s460 = scalar_lea.vmem %s149, %s459 [#allocation2]
        %v461 = vld [vmem:[%s460] sm:$0xff]
        %v462 = vld [vmem:[%s460 + $0x40] sm:$0xff]
        %v463 = vld [vmem:[%s460 + $0x80] sm:$0xff]
        %v464 = vld [vmem:[%s460 + $0xc0] sm:$0xff]
        %v465 = vld [vmem:[%s460 + $0x100] sm:$0xff]
        %v466 = vld [vmem:[%s460 + $0x140] sm:$0xff]
        %v467 = vld [vmem:[%s460 + $0x180] sm:$0xff]
        %v468 = vld [vmem:[%s460 + $0x1c0] sm:$0xff]
        %v469 = vld [vmem:[%s460 + $0x200] sm:$0xff]
        %v470 = vld [vmem:[%s460 + $0x240] sm:$0xff]
        %v471 = vld [vmem:[%s460 + $0x280] sm:$0xff]
        %v472 = vld [vmem:[%s460 + $0x2c0] sm:$0xff]
        %v473 = vld [vmem:[%s460 + $0x300] sm:$0xff]
        %v474 = vld [vmem:[%s460 + $0x340] sm:$0xff]
        %v475 = vld [vmem:[%s460 + $0x380] sm:$0xff]
        %v476 = vld [vmem:[%s460 + $0x3c0] sm:$0xff]
        %477 = vxpose.xlu0.b32.start [1/16] %v461, 128
        %478 = vxpose.xlu0.b32.cont [2/16] %v462, 128
        %479 = vxpose.xlu0.b32.cont [3/16] %v463, 128
        %480 = vxpose.xlu0.b32.cont [4/16] %v464, 128
        %481 = vxpose.xlu0.b32.cont [5/16] %v465, 128
        %482 = vxpose.xlu0.b32.cont [6/16] %v466, 128
        %483 = vxpose.xlu0.b32.cont [7/16] %v467, 128
        %484 = vxpose.xlu0.b32.cont [8/16] %v468, 128
        %485 = vxpose.xlu0.b32.cont [9/16] %v469, 128
        %486 = vxpose.xlu0.b32.cont [10/16] %v470, 128
        %487 = vxpose.xlu0.b32.cont [11/16] %v471, 128
        %488 = vxpose.xlu0.b32.cont [12/16] %v472, 128
        %489 = vxpose.xlu0.b32.cont [13/16] %v473, 128
        %490 = vxpose.xlu0.b32.cont [14/16] %v474, 128
        %491 = vxpose.xlu0.b32.cont [15/16] %v475, 128
        %492 = vxpose.xlu0.b32.end [16/16] %v476, 128
        %v493 = vpop.trf.xlu0
        %v494 = vpop.trf.xlu0
        %v495 = vpop.trf.xlu0
        %v496 = vpop.trf.xlu0
        %v497 = vpop.trf.xlu0
        %v498 = vpop.trf.xlu0
        %v499 = vpop.trf.xlu0
        %v500 = vpop.trf.xlu0
        %v501 = vpop.trf.xlu0
        %v502 = vpop.trf.xlu0
        %v503 = vpop.trf.xlu0
        %v504 = vpop.trf.xlu0
        %v505 = vpop.trf.xlu0
        %v506 = vpop.trf.xlu0
        %v507 = vpop.trf.xlu0
        %v508 = vpop.trf.xlu0
        %s509 = smul.u32 64, 2
        %s510 = sadd.s32 0, %s509
        %s511 = smul.addr %s510, 8
        %s512 = scalar_lea.vmem %s168, %s511 [#allocation5]
        %513 = vst [vmem:[%s512] sm:$0xff] %v493
        %514 = vst [vmem:[%s512 + $0x10] sm:$0xff] %v494
        %515 = vst [vmem:[%s512 + $0x20] sm:$0xff] %v495
        %516 = vst [vmem:[%s512 + $0x30] sm:$0xff] %v496
        %517 = vst [vmem:[%s512 + $0x40] sm:$0xff] %v497
        %518 = vst [vmem:[%s512 + $0x50] sm:$0xff] %v498
        %519 = vst [vmem:[%s512 + $0x60] sm:$0xff] %v499
        %520 = vst [vmem:[%s512 + $0x70] sm:$0xff] %v500
        %521 = vst [vmem:[%s512 + $0x80] sm:$0xff] %v501
        %522 = vst [vmem:[%s512 + $0x90] sm:$0xff] %v502
        %523 = vst [vmem:[%s512 + $0xa0] sm:$0xff] %v503
        %524 = vst [vmem:[%s512 + $0xb0] sm:$0xff] %v504
        %525 = vst [vmem:[%s512 + $0xc0] sm:$0xff] %v505
        %526 = vst [vmem:[%s512 + $0xd0] sm:$0xff] %v506
        %527 = vst [vmem:[%s512 + $0xe0] sm:$0xff] %v507
        %528 = vst [vmem:[%s512 + $0xf0] sm:$0xff] %v508
        %s529 = sadd.s32 5, %s173
        %s530 = smul.addr %s529, 8
        %s531 = scalar_lea.vmem %s149, %s530 [#allocation2]
        %v532 = vld [vmem:[%s531] sm:$0xff]
        %v533 = vld [vmem:[%s531 + $0x40] sm:$0xff]
        %v534 = vld [vmem:[%s531 + $0x80] sm:$0xff]
        %v535 = vld [vmem:[%s531 + $0xc0] sm:$0xff]
        %v536 = vld [vmem:[%s531 + $0x100] sm:$0xff]
        %v537 = vld [vmem:[%s531 + $0x140] sm:$0xff]
        %v538 = vld [vmem:[%s531 + $0x180] sm:$0xff]
        %v539 = vld [vmem:[%s531 + $0x1c0] sm:$0xff]
        %v540 = vld [vmem:[%s531 + $0x200] sm:$0xff]
        %v541 = vld [vmem:[%s531 + $0x240] sm:$0xff]
        %v542 = vld [vmem:[%s531 + $0x280] sm:$0xff]
        %v543 = vld [vmem:[%s531 + $0x2c0] sm:$0xff]
        %v544 = vld [vmem:[%s531 + $0x300] sm:$0xff]
        %v545 = vld [vmem:[%s531 + $0x340] sm:$0xff]
        %v546 = vld [vmem:[%s531 + $0x380] sm:$0xff]
        %v547 = vld [vmem:[%s531 + $0x3c0] sm:$0xff]
        %548 = vxpose.xlu0.b32.start [1/16] %v532, 128
        %549 = vxpose.xlu0.b32.cont [2/16] %v533, 128
        %550 = vxpose.xlu0.b32.cont [3/16] %v534, 128
        %551 = vxpose.xlu0.b32.cont [4/16] %v535, 128
        %552 = vxpose.xlu0.b32.cont [5/16] %v536, 128
        %553 = vxpose.xlu0.b32.cont [6/16] %v537, 128
        %554 = vxpose.xlu0.b32.cont [7/16] %v538, 128
        %555 = vxpose.xlu0.b32.cont [8/16] %v539, 128
        %556 = vxpose.xlu0.b32.cont [9/16] %v540, 128
        %557 = vxpose.xlu0.b32.cont [10/16] %v541, 128
        %558 = vxpose.xlu0.b32.cont [11/16] %v542, 128
        %559 = vxpose.xlu0.b32.cont [12/16] %v543, 128
        %560 = vxpose.xlu0.b32.cont [13/16] %v544, 128
        %561 = vxpose.xlu0.b32.cont [14/16] %v545, 128
        %562 = vxpose.xlu0.b32.cont [15/16] %v546, 128
        %563 = vxpose.xlu0.b32.end [16/16] %v547, 128
        %v564 = vpop.trf.xlu0
        %v565 = vpop.trf.xlu0
        %v566 = vpop.trf.xlu0
        %v567 = vpop.trf.xlu0
        %v568 = vpop.trf.xlu0
        %v569 = vpop.trf.xlu0
        %v570 = vpop.trf.xlu0
        %v571 = vpop.trf.xlu0
        %v572 = vpop.trf.xlu0
        %v573 = vpop.trf.xlu0
        %v574 = vpop.trf.xlu0
        %v575 = vpop.trf.xlu0
        %v576 = vpop.trf.xlu0
        %v577 = vpop.trf.xlu0
        %v578 = vpop.trf.xlu0
        %v579 = vpop.trf.xlu0
        %s580 = smul.u32 80, 2
        %s581 = sadd.s32 0, %s580
        %s582 = smul.addr %s581, 8
        %s583 = scalar_lea.vmem %s168, %s582 [#allocation5]
        %584 = vst [vmem:[%s583] sm:$0xff] %v564
        %585 = vst [vmem:[%s583 + $0x10] sm:$0xff] %v565
        %586 = vst [vmem:[%s583 + $0x20] sm:$0xff] %v566
        %587 = vst [vmem:[%s583 + $0x30] sm:$0xff] %v567
        %588 = vst [vmem:[%s583 + $0x40] sm:$0xff] %v568
        %589 = vst [vmem:[%s583 + $0x50] sm:$0xff] %v569
        %590 = vst [vmem:[%s583 + $0x60] sm:$0xff] %v570
        %591 = vst [vmem:[%s583 + $0x70] sm:$0xff] %v571
        %592 = vst [vmem:[%s583 + $0x80] sm:$0xff] %v572
        %593 = vst [vmem:[%s583 + $0x90] sm:$0xff] %v573
        %594 = vst [vmem:[%s583 + $0xa0] sm:$0xff] %v574
        %595 = vst [vmem:[%s583 + $0xb0] sm:$0xff] %v575
        %596 = vst [vmem:[%s583 + $0xc0] sm:$0xff] %v576
        %597 = vst [vmem:[%s583 + $0xd0] sm:$0xff] %v577
        %598 = vst [vmem:[%s583 + $0xe0] sm:$0xff] %v578
        %599 = vst [vmem:[%s583 + $0xf0] sm:$0xff] %v579
        %s600 = sadd.s32 6, %s173
        %s601 = smul.addr %s600, 8
        %s602 = scalar_lea.vmem %s149, %s601 [#allocation2]
        %v603 = vld [vmem:[%s602] sm:$0xff]
        %v604 = vld [vmem:[%s602 + $0x40] sm:$0xff]
        %v605 = vld [vmem:[%s602 + $0x80] sm:$0xff]
        %v606 = vld [vmem:[%s602 + $0xc0] sm:$0xff]
        %v607 = vld [vmem:[%s602 + $0x100] sm:$0xff]
        %v608 = vld [vmem:[%s602 + $0x140] sm:$0xff]
        %v609 = vld [vmem:[%s602 + $0x180] sm:$0xff]
        %v610 = vld [vmem:[%s602 + $0x1c0] sm:$0xff]
        %v611 = vld [vmem:[%s602 + $0x200] sm:$0xff]
        %v612 = vld [vmem:[%s602 + $0x240] sm:$0xff]
        %v613 = vld [vmem:[%s602 + $0x280] sm:$0xff]
        %v614 = vld [vmem:[%s602 + $0x2c0] sm:$0xff]
        %v615 = vld [vmem:[%s602 + $0x300] sm:$0xff]
        %v616 = vld [vmem:[%s602 + $0x340] sm:$0xff]
        %v617 = vld [vmem:[%s602 + $0x380] sm:$0xff]
        %v618 = vld [vmem:[%s602 + $0x3c0] sm:$0xff]
        %619 = vxpose.xlu0.b32.start [1/16] %v603, 128
        %620 = vxpose.xlu0.b32.cont [2/16] %v604, 128
        %621 = vxpose.xlu0.b32.cont [3/16] %v605, 128
        %622 = vxpose.xlu0.b32.cont [4/16] %v606, 128
        %623 = vxpose.xlu0.b32.cont [5/16] %v607, 128
        %624 = vxpose.xlu0.b32.cont [6/16] %v608, 128
        %625 = vxpose.xlu0.b32.cont [7/16] %v609, 128
        %626 = vxpose.xlu0.b32.cont [8/16] %v610, 128
        %627 = vxpose.xlu0.b32.cont [9/16] %v611, 128
        %628 = vxpose.xlu0.b32.cont [10/16] %v612, 128
        %629 = vxpose.xlu0.b32.cont [11/16] %v613, 128
        %630 = vxpose.xlu0.b32.cont [12/16] %v614, 128
        %631 = vxpose.xlu0.b32.cont [13/16] %v615, 128
        %632 = vxpose.xlu0.b32.cont [14/16] %v616, 128
        %633 = vxpose.xlu0.b32.cont [15/16] %v617, 128
        %634 = vxpose.xlu0.b32.end [16/16] %v618, 128
        %v635 = vpop.trf.xlu0
        %v636 = vpop.trf.xlu0
        %v637 = vpop.trf.xlu0
        %v638 = vpop.trf.xlu0
        %v639 = vpop.trf.xlu0
        %v640 = vpop.trf.xlu0
        %v641 = vpop.trf.xlu0
        %v642 = vpop.trf.xlu0
        %v643 = vpop.trf.xlu0
        %v644 = vpop.trf.xlu0
        %v645 = vpop.trf.xlu0
        %v646 = vpop.trf.xlu0
        %v647 = vpop.trf.xlu0
        %v648 = vpop.trf.xlu0
        %v649 = vpop.trf.xlu0
        %v650 = vpop.trf.xlu0
        %s651 = smul.u32 96, 2
        %s652 = sadd.s32 0, %s651
        %s653 = smul.addr %s652, 8
        %s654 = scalar_lea.vmem %s168, %s653 [#allocation5]
        %655 = vst [vmem:[%s654] sm:$0xff] %v635
        %656 = vst [vmem:[%s654 + $0x10] sm:$0xff] %v636
        %657 = vst [vmem:[%s654 + $0x20] sm:$0xff] %v637
        %658 = vst [vmem:[%s654 + $0x30] sm:$0xff] %v638
        %659 = vst [vmem:[%s654 + $0x40] sm:$0xff] %v639
        %660 = vst [vmem:[%s654 + $0x50] sm:$0xff] %v640
        %661 = vst [vmem:[%s654 + $0x60] sm:$0xff] %v641
        %662 = vst [vmem:[%s654 + $0x70] sm:$0xff] %v642
        %663 = vst [vmem:[%s654 + $0x80] sm:$0xff] %v643
        %664 = vst [vmem:[%s654 + $0x90] sm:$0xff] %v644
        %665 = vst [vmem:[%s654 + $0xa0] sm:$0xff] %v645
        %666 = vst [vmem:[%s654 + $0xb0] sm:$0xff] %v646
        %667 = vst [vmem:[%s654 + $0xc0] sm:$0xff] %v647
        %668 = vst [vmem:[%s654 + $0xd0] sm:$0xff] %v648
        %669 = vst [vmem:[%s654 + $0xe0] sm:$0xff] %v649
        %670 = vst [vmem:[%s654 + $0xf0] sm:$0xff] %v650
        %s671 = sadd.s32 7, %s173
        %s672 = smul.addr %s671, 8
        %s673 = scalar_lea.vmem %s149, %s672 [#allocation2]
        %v674 = vld [vmem:[%s673] sm:$0xff]
        %v675 = vld [vmem:[%s673 + $0x40] sm:$0xff]
        %v676 = vld [vmem:[%s673 + $0x80] sm:$0xff]
        %v677 = vld [vmem:[%s673 + $0xc0] sm:$0xff]
        %v678 = vld [vmem:[%s673 + $0x100] sm:$0xff]
        %v679 = vld [vmem:[%s673 + $0x140] sm:$0xff]
        %v680 = vld [vmem:[%s673 + $0x180] sm:$0xff]
        %v681 = vld [vmem:[%s673 + $0x1c0] sm:$0xff]
        %v682 = vld [vmem:[%s673 + $0x200] sm:$0xff]
        %v683 = vld [vmem:[%s673 + $0x240] sm:$0xff]
        %v684 = vld [vmem:[%s673 + $0x280] sm:$0xff]
        %v685 = vld [vmem:[%s673 + $0x2c0] sm:$0xff]
        %v686 = vld [vmem:[%s673 + $0x300] sm:$0xff]
        %v687 = vld [vmem:[%s673 + $0x340] sm:$0xff]
        %v688 = vld [vmem:[%s673 + $0x380] sm:$0xff]
        %v689 = vld [vmem:[%s673 + $0x3c0] sm:$0xff]
        %690 = vxpose.xlu0.b32.start [1/16] %v674, 128
        %691 = vxpose.xlu0.b32.cont [2/16] %v675, 128
        %692 = vxpose.xlu0.b32.cont [3/16] %v676, 128
        %693 = vxpose.xlu0.b32.cont [4/16] %v677, 128
        %694 = vxpose.xlu0.b32.cont [5/16] %v678, 128
        %695 = vxpose.xlu0.b32.cont [6/16] %v679, 128
        %696 = vxpose.xlu0.b32.cont [7/16] %v680, 128
        %697 = vxpose.xlu0.b32.cont [8/16] %v681, 128
        %698 = vxpose.xlu0.b32.cont [9/16] %v682, 128
        %699 = vxpose.xlu0.b32.cont [10/16] %v683, 128
        %700 = vxpose.xlu0.b32.cont [11/16] %v684, 128
        %701 = vxpose.xlu0.b32.cont [12/16] %v685, 128
        %702 = vxpose.xlu0.b32.cont [13/16] %v686, 128
        %703 = vxpose.xlu0.b32.cont [14/16] %v687, 128
        %704 = vxpose.xlu0.b32.cont [15/16] %v688, 128
        %705 = vxpose.xlu0.b32.end [16/16] %v689, 128
        %v706 = vpop.trf.xlu0
        %v707 = vpop.trf.xlu0
        %v708 = vpop.trf.xlu0
        %v709 = vpop.trf.xlu0
        %v710 = vpop.trf.xlu0
        %v711 = vpop.trf.xlu0
        %v712 = vpop.trf.xlu0
        %v713 = vpop.trf.xlu0
        %v714 = vpop.trf.xlu0
        %v715 = vpop.trf.xlu0
        %v716 = vpop.trf.xlu0
        %v717 = vpop.trf.xlu0
        %v718 = vpop.trf.xlu0
        %v719 = vpop.trf.xlu0
        %v720 = vpop.trf.xlu0
        %v721 = vpop.trf.xlu0
        %s722 = smul.u32 112, 2
        %s723 = sadd.s32 0, %s722
        %s724 = smul.addr %s723, 8
        %s725 = scalar_lea.vmem %s168, %s724 [#allocation5]
        %726 = vst [vmem:[%s725] sm:$0xff] %v706
        %727 = vst [vmem:[%s725 + $0x10] sm:$0xff] %v707
        %728 = vst [vmem:[%s725 + $0x20] sm:$0xff] %v708
        %729 = vst [vmem:[%s725 + $0x30] sm:$0xff] %v709
        %730 = vst [vmem:[%s725 + $0x40] sm:$0xff] %v710
        %731 = vst [vmem:[%s725 + $0x50] sm:$0xff] %v711
        %732 = vst [vmem:[%s725 + $0x60] sm:$0xff] %v712
        %733 = vst [vmem:[%s725 + $0x70] sm:$0xff] %v713
        %734 = vst [vmem:[%s725 + $0x80] sm:$0xff] %v714
        %735 = vst [vmem:[%s725 + $0x90] sm:$0xff] %v715
        %736 = vst [vmem:[%s725 + $0xa0] sm:$0xff] %v716
        %737 = vst [vmem:[%s725 + $0xb0] sm:$0xff] %v717
        %738 = vst [vmem:[%s725 + $0xc0] sm:$0xff] %v718
        %739 = vst [vmem:[%s725 + $0xd0] sm:$0xff] %v719
        %740 = vst [vmem:[%s725 + $0xe0] sm:$0xff] %v720
        %741 = vst [vmem:[%s725 + $0xf0] sm:$0xff] %v721
        %s742 = smul.u32 16, 8
        %s743 = sadd.s32 0, %s742
        %s744 = smul.addr %s743, 8
        %s745 = scalar_lea.vmem %s149, %s744 [#allocation2]
        %v746 = vld [vmem:[%s745] sm:$0xff]
        %v747 = vld [vmem:[%s745 + $0x40] sm:$0xff]
        %v748 = vld [vmem:[%s745 + $0x80] sm:$0xff]
        %v749 = vld [vmem:[%s745 + $0xc0] sm:$0xff]
        %v750 = vld [vmem:[%s745 + $0x100] sm:$0xff]
        %v751 = vld [vmem:[%s745 + $0x140] sm:$0xff]
        %v752 = vld [vmem:[%s745 + $0x180] sm:$0xff]
        %v753 = vld [vmem:[%s745 + $0x1c0] sm:$0xff]
        %v754 = vld [vmem:[%s745 + $0x200] sm:$0xff]
        %v755 = vld [vmem:[%s745 + $0x240] sm:$0xff]
        %v756 = vld [vmem:[%s745 + $0x280] sm:$0xff]
        %v757 = vld [vmem:[%s745 + $0x2c0] sm:$0xff]
        %v758 = vld [vmem:[%s745 + $0x300] sm:$0xff]
        %v759 = vld [vmem:[%s745 + $0x340] sm:$0xff]
        %v760 = vld [vmem:[%s745 + $0x380] sm:$0xff]
        %v761 = vld [vmem:[%s745 + $0x3c0] sm:$0xff]
        %762 = vxpose.xlu0.b32.start [1/16] %v746, 128
        %763 = vxpose.xlu0.b32.cont [2/16] %v747, 128
        %764 = vxpose.xlu0.b32.cont [3/16] %v748, 128
        %765 = vxpose.xlu0.b32.cont [4/16] %v749, 128
        %766 = vxpose.xlu0.b32.cont [5/16] %v750, 128
        %767 = vxpose.xlu0.b32.cont [6/16] %v751, 128
        %768 = vxpose.xlu0.b32.cont [7/16] %v752, 128
        %769 = vxpose.xlu0.b32.cont [8/16] %v753, 128
        %770 = vxpose.xlu0.b32.cont [9/16] %v754, 128
        %771 = vxpose.xlu0.b32.cont [10/16] %v755, 128
        %772 = vxpose.xlu0.b32.cont [11/16] %v756, 128
        %773 = vxpose.xlu0.b32.cont [12/16] %v757, 128
        %774 = vxpose.xlu0.b32.cont [13/16] %v758, 128
        %775 = vxpose.xlu0.b32.cont [14/16] %v759, 128
        %776 = vxpose.xlu0.b32.cont [15/16] %v760, 128
        %777 = vxpose.xlu0.b32.end [16/16] %v761, 128
        %v778 = vpop.trf.xlu0
        %v779 = vpop.trf.xlu0
        %v780 = vpop.trf.xlu0
        %v781 = vpop.trf.xlu0
        %v782 = vpop.trf.xlu0
        %v783 = vpop.trf.xlu0
        %v784 = vpop.trf.xlu0
        %v785 = vpop.trf.xlu0
        %v786 = vpop.trf.xlu0
        %v787 = vpop.trf.xlu0
        %v788 = vpop.trf.xlu0
        %v789 = vpop.trf.xlu0
        %v790 = vpop.trf.xlu0
        %v791 = vpop.trf.xlu0
        %v792 = vpop.trf.xlu0
        %v793 = vpop.trf.xlu0
        %s794 = sadd.s32 1, %s225
        %s795 = smul.addr %s794, 8
        %s796 = scalar_lea.vmem %s168, %s795 [#allocation5]
        %797 = vst [vmem:[%s796] sm:$0xff] %v778
        %798 = vst [vmem:[%s796 + $0x10] sm:$0xff] %v779
        %799 = vst [vmem:[%s796 + $0x20] sm:$0xff] %v780
        %800 = vst [vmem:[%s796 + $0x30] sm:$0xff] %v781
        %801 = vst [vmem:[%s796 + $0x40] sm:$0xff] %v782
        %802 = vst [vmem:[%s796 + $0x50] sm:$0xff] %v783
        %803 = vst [vmem:[%s796 + $0x60] sm:$0xff] %v784
        %804 = vst [vmem:[%s796 + $0x70] sm:$0xff] %v785
        %805 = vst [vmem:[%s796 + $0x80] sm:$0xff] %v786
        %806 = vst [vmem:[%s796 + $0x90] sm:$0xff] %v787
        %807 = vst [vmem:[%s796 + $0xa0] sm:$0xff] %v788
        %808 = vst [vmem:[%s796 + $0xb0] sm:$0xff] %v789
        %809 = vst [vmem:[%s796 + $0xc0] sm:$0xff] %v790
        %810 = vst [vmem:[%s796 + $0xd0] sm:$0xff] %v791
        %811 = vst [vmem:[%s796 + $0xe0] sm:$0xff] %v792
        %812 = vst [vmem:[%s796 + $0xf0] sm:$0xff] %v793
        %s813 = sadd.s32 1, %s742
        %s814 = smul.addr %s813, 8
        %s815 = scalar_lea.vmem %s149, %s814 [#allocation2]
        %v816 = vld [vmem:[%s815] sm:$0xff]
        %v817 = vld [vmem:[%s815 + $0x40] sm:$0xff]
        %v818 = vld [vmem:[%s815 + $0x80] sm:$0xff]
        %v819 = vld [vmem:[%s815 + $0xc0] sm:$0xff]
        %v820 = vld [vmem:[%s815 + $0x100] sm:$0xff]
        %v821 = vld [vmem:[%s815 + $0x140] sm:$0xff]
        %v822 = vld [vmem:[%s815 + $0x180] sm:$0xff]
        %v823 = vld [vmem:[%s815 + $0x1c0] sm:$0xff]
        %v824 = vld [vmem:[%s815 + $0x200] sm:$0xff]
        %v825 = vld [vmem:[%s815 + $0x240] sm:$0xff]
        %v826 = vld [vmem:[%s815 + $0x280] sm:$0xff]
        %v827 = vld [vmem:[%s815 + $0x2c0] sm:$0xff]
        %v828 = vld [vmem:[%s815 + $0x300] sm:$0xff]
        %v829 = vld [vmem:[%s815 + $0x340] sm:$0xff]
        %v830 = vld [vmem:[%s815 + $0x380] sm:$0xff]
        %v831 = vld [vmem:[%s815 + $0x3c0] sm:$0xff]
        %832 = vxpose.xlu0.b32.start [1/16] %v816, 128
        %833 = vxpose.xlu0.b32.cont [2/16] %v817, 128
        %834 = vxpose.xlu0.b32.cont [3/16] %v818, 128
        %835 = vxpose.xlu0.b32.cont [4/16] %v819, 128
        %836 = vxpose.xlu0.b32.cont [5/16] %v820, 128
        %837 = vxpose.xlu0.b32.cont [6/16] %v821, 128
        %838 = vxpose.xlu0.b32.cont [7/16] %v822, 128
        %839 = vxpose.xlu0.b32.cont [8/16] %v823, 128
        %840 = vxpose.xlu0.b32.cont [9/16] %v824, 128
        %841 = vxpose.xlu0.b32.cont [10/16] %v825, 128
        %842 = vxpose.xlu0.b32.cont [11/16] %v826, 128
        %843 = vxpose.xlu0.b32.cont [12/16] %v827, 128
        %844 = vxpose.xlu0.b32.cont [13/16] %v828, 128
        %845 = vxpose.xlu0.b32.cont [14/16] %v829, 128
        %846 = vxpose.xlu0.b32.cont [15/16] %v830, 128
        %847 = vxpose.xlu0.b32.end [16/16] %v831, 128
        %v848 = vpop.trf.xlu0
        %v849 = vpop.trf.xlu0
        %v850 = vpop.trf.xlu0
        %v851 = vpop.trf.xlu0
        %v852 = vpop.trf.xlu0
        %v853 = vpop.trf.xlu0
        %v854 = vpop.trf.xlu0
        %v855 = vpop.trf.xlu0
        %v856 = vpop.trf.xlu0
        %v857 = vpop.trf.xlu0
        %v858 = vpop.trf.xlu0
        %v859 = vpop.trf.xlu0
        %v860 = vpop.trf.xlu0
        %v861 = vpop.trf.xlu0
        %v862 = vpop.trf.xlu0
        %v863 = vpop.trf.xlu0
        %s864 = sadd.s32 1, %s296
        %s865 = smul.addr %s864, 8
        %s866 = scalar_lea.vmem %s168, %s865 [#allocation5]
        %867 = vst [vmem:[%s866] sm:$0xff] %v848
        %868 = vst [vmem:[%s866 + $0x10] sm:$0xff] %v849
        %869 = vst [vmem:[%s866 + $0x20] sm:$0xff] %v850
        %870 = vst [vmem:[%s866 + $0x30] sm:$0xff] %v851
        %871 = vst [vmem:[%s866 + $0x40] sm:$0xff] %v852
        %872 = vst [vmem:[%s866 + $0x50] sm:$0xff] %v853
        %873 = vst [vmem:[%s866 + $0x60] sm:$0xff] %v854
        %874 = vst [vmem:[%s866 + $0x70] sm:$0xff] %v855
        %875 = vst [vmem:[%s866 + $0x80] sm:$0xff] %v856
        %876 = vst [vmem:[%s866 + $0x90] sm:$0xff] %v857
        %877 = vst [vmem:[%s866 + $0xa0] sm:$0xff] %v858
        %878 = vst [vmem:[%s866 + $0xb0] sm:$0xff] %v859
        %879 = vst [vmem:[%s866 + $0xc0] sm:$0xff] %v860
        %880 = vst [vmem:[%s866 + $0xd0] sm:$0xff] %v861
        %881 = vst [vmem:[%s866 + $0xe0] sm:$0xff] %v862
        %882 = vst [vmem:[%s866 + $0xf0] sm:$0xff] %v863
        %s883 = sadd.s32 2, %s742
        %s884 = smul.addr %s883, 8
        %s885 = scalar_lea.vmem %s149, %s884 [#allocation2]
        %v886 = vld [vmem:[%s885] sm:$0xff]
        %v887 = vld [vmem:[%s885 + $0x40] sm:$0xff]
        %v888 = vld [vmem:[%s885 + $0x80] sm:$0xff]
        %v889 = vld [vmem:[%s885 + $0xc0] sm:$0xff]
        %v890 = vld [vmem:[%s885 + $0x100] sm:$0xff]
        %v891 = vld [vmem:[%s885 + $0x140] sm:$0xff]
        %v892 = vld [vmem:[%s885 + $0x180] sm:$0xff]
        %v893 = vld [vmem:[%s885 + $0x1c0] sm:$0xff]
        %v894 = vld [vmem:[%s885 + $0x200] sm:$0xff]
        %v895 = vld [vmem:[%s885 + $0x240] sm:$0xff]
        %v896 = vld [vmem:[%s885 + $0x280] sm:$0xff]
        %v897 = vld [vmem:[%s885 + $0x2c0] sm:$0xff]
        %v898 = vld [vmem:[%s885 + $0x300] sm:$0xff]
        %v899 = vld [vmem:[%s885 + $0x340] sm:$0xff]
        %v900 = vld [vmem:[%s885 + $0x380] sm:$0xff]
        %v901 = vld [vmem:[%s885 + $0x3c0] sm:$0xff]
        %902 = vxpose.xlu0.b32.start [1/16] %v886, 128
        %903 = vxpose.xlu0.b32.cont [2/16] %v887, 128
        %904 = vxpose.xlu0.b32.cont [3/16] %v888, 128
        %905 = vxpose.xlu0.b32.cont [4/16] %v889, 128
        %906 = vxpose.xlu0.b32.cont [5/16] %v890, 128
        %907 = vxpose.xlu0.b32.cont [6/16] %v891, 128
        %908 = vxpose.xlu0.b32.cont [7/16] %v892, 128
        %909 = vxpose.xlu0.b32.cont [8/16] %v893, 128
        %910 = vxpose.xlu0.b32.cont [9/16] %v894, 128
        %911 = vxpose.xlu0.b32.cont [10/16] %v895, 128
        %912 = vxpose.xlu0.b32.cont [11/16] %v896, 128
        %913 = vxpose.xlu0.b32.cont [12/16] %v897, 128
        %914 = vxpose.xlu0.b32.cont [13/16] %v898, 128
        %915 = vxpose.xlu0.b32.cont [14/16] %v899, 128
        %916 = vxpose.xlu0.b32.cont [15/16] %v900, 128
        %917 = vxpose.xlu0.b32.end [16/16] %v901, 128
        %v918 = vpop.trf.xlu0
        %v919 = vpop.trf.xlu0
        %v920 = vpop.trf.xlu0
        %v921 = vpop.trf.xlu0
        %v922 = vpop.trf.xlu0
        %v923 = vpop.trf.xlu0
        %v924 = vpop.trf.xlu0
        %v925 = vpop.trf.xlu0
        %v926 = vpop.trf.xlu0
        %v927 = vpop.trf.xlu0
        %v928 = vpop.trf.xlu0
        %v929 = vpop.trf.xlu0
        %v930 = vpop.trf.xlu0
        %v931 = vpop.trf.xlu0
        %v932 = vpop.trf.xlu0
        %v933 = vpop.trf.xlu0
        %s934 = sadd.s32 1, %s367
        %s935 = smul.addr %s934, 8
        %s936 = scalar_lea.vmem %s168, %s935 [#allocation5]
        %937 = vst [vmem:[%s936] sm:$0xff] %v918
        %938 = vst [vmem:[%s936 + $0x10] sm:$0xff] %v919
        %939 = vst [vmem:[%s936 + $0x20] sm:$0xff] %v920
        %940 = vst [vmem:[%s936 + $0x30] sm:$0xff] %v921
        %941 = vst [vmem:[%s936 + $0x40] sm:$0xff] %v922
        %942 = vst [vmem:[%s936 + $0x50] sm:$0xff] %v923
        %943 = vst [vmem:[%s936 + $0x60] sm:$0xff] %v924
        %944 = vst [vmem:[%s936 + $0x70] sm:$0xff] %v925
        %945 = vst [vmem:[%s936 + $0x80] sm:$0xff] %v926
        %946 = vst [vmem:[%s936 + $0x90] sm:$0xff] %v927
        %947 = vst [vmem:[%s936 + $0xa0] sm:$0xff] %v928
        %948 = vst [vmem:[%s936 + $0xb0] sm:$0xff] %v929
        %949 = vst [vmem:[%s936 + $0xc0] sm:$0xff] %v930
        %950 = vst [vmem:[%s936 + $0xd0] sm:$0xff] %v931
        %951 = vst [vmem:[%s936 + $0xe0] sm:$0xff] %v932
        %952 = vst [vmem:[%s936 + $0xf0] sm:$0xff] %v933
        %s953 = sadd.s32 3, %s742
        %s954 = smul.addr %s953, 8
        %s955 = scalar_lea.vmem %s149, %s954 [#allocation2]
        %v956 = vld [vmem:[%s955] sm:$0xff]
        %v957 = vld [vmem:[%s955 + $0x40] sm:$0xff]
        %v958 = vld [vmem:[%s955 + $0x80] sm:$0xff]
        %v959 = vld [vmem:[%s955 + $0xc0] sm:$0xff]
        %v960 = vld [vmem:[%s955 + $0x100] sm:$0xff]
        %v961 = vld [vmem:[%s955 + $0x140] sm:$0xff]
        %v962 = vld [vmem:[%s955 + $0x180] sm:$0xff]
        %v963 = vld [vmem:[%s955 + $0x1c0] sm:$0xff]
        %v964 = vld [vmem:[%s955 + $0x200] sm:$0xff]
        %v965 = vld [vmem:[%s955 + $0x240] sm:$0xff]
        %v966 = vld [vmem:[%s955 + $0x280] sm:$0xff]
        %v967 = vld [vmem:[%s955 + $0x2c0] sm:$0xff]
        %v968 = vld [vmem:[%s955 + $0x300] sm:$0xff]
        %v969 = vld [vmem:[%s955 + $0x340] sm:$0xff]
        %v970 = vld [vmem:[%s955 + $0x380] sm:$0xff]
        %v971 = vld [vmem:[%s955 + $0x3c0] sm:$0xff]
        %972 = vxpose.xlu0.b32.start [1/16] %v956, 128
        %973 = vxpose.xlu0.b32.cont [2/16] %v957, 128
        %974 = vxpose.xlu0.b32.cont [3/16] %v958, 128
        %975 = vxpose.xlu0.b32.cont [4/16] %v959, 128
        %976 = vxpose.xlu0.b32.cont [5/16] %v960, 128
        %977 = vxpose.xlu0.b32.cont [6/16] %v961, 128
        %978 = vxpose.xlu0.b32.cont [7/16] %v962, 128
        %979 = vxpose.xlu0.b32.cont [8/16] %v963, 128
        %980 = vxpose.xlu0.b32.cont [9/16] %v964, 128
        %981 = vxpose.xlu0.b32.cont [10/16] %v965, 128
        %982 = vxpose.xlu0.b32.cont [11/16] %v966, 128
        %983 = vxpose.xlu0.b32.cont [12/16] %v967, 128
        %984 = vxpose.xlu0.b32.cont [13/16] %v968, 128
        %985 = vxpose.xlu0.b32.cont [14/16] %v969, 128
        %986 = vxpose.xlu0.b32.cont [15/16] %v970, 128
        %987 = vxpose.xlu0.b32.end [16/16] %v971, 128
        %v988 = vpop.trf.xlu0
        %v989 = vpop.trf.xlu0
        %v990 = vpop.trf.xlu0
        %v991 = vpop.trf.xlu0
        %v992 = vpop.trf.xlu0
        %v993 = vpop.trf.xlu0
        %v994 = vpop.trf.xlu0
        %v995 = vpop.trf.xlu0
        %v996 = vpop.trf.xlu0
        %v997 = vpop.trf.xlu0
        %v998 = vpop.trf.xlu0
        %v999 = vpop.trf.xlu0
        %v1000 = vpop.trf.xlu0
        %v1001 = vpop.trf.xlu0
        %v1002 = vpop.trf.xlu0
        %v1003 = vpop.trf.xlu0
        %s1004 = sadd.s32 1, %s438
        %s1005 = smul.addr %s1004, 8
        %s1006 = scalar_lea.vmem %s168, %s1005 [#allocation5]
        %1007 = vst [vmem:[%s1006] sm:$0xff] %v988
        %1008 = vst [vmem:[%s1006 + $0x10] sm:$0xff] %v989
        %1009 = vst [vmem:[%s1006 + $0x20] sm:$0xff] %v990
        %1010 = vst [vmem:[%s1006 + $0x30] sm:$0xff] %v991
        %1011 = vst [vmem:[%s1006 + $0x40] sm:$0xff] %v992
        %1012 = vst [vmem:[%s1006 + $0x50] sm:$0xff] %v993
        %1013 = vst [vmem:[%s1006 + $0x60] sm:$0xff] %v994
        %1014 = vst [vmem:[%s1006 + $0x70] sm:$0xff] %v995
        %1015 = vst [vmem:[%s1006 + $0x80] sm:$0xff] %v996
        %1016 = vst [vmem:[%s1006 + $0x90] sm:$0xff] %v997
        %1017 = vst [vmem:[%s1006 + $0xa0] sm:$0xff] %v998
        %1018 = vst [vmem:[%s1006 + $0xb0] sm:$0xff] %v999
        %1019 = vst [vmem:[%s1006 + $0xc0] sm:$0xff] %v1000
        %1020 = vst [vmem:[%s1006 + $0xd0] sm:$0xff] %v1001
        %1021 = vst [vmem:[%s1006 + $0xe0] sm:$0xff] %v1002
        %1022 = vst [vmem:[%s1006 + $0xf0] sm:$0xff] %v1003
        %s1023 = sadd.s32 4, %s742
        %s1024 = smul.addr %s1023, 8
        %s1025 = scalar_lea.vmem %s149, %s1024 [#allocation2]
        %v1026 = vld [vmem:[%s1025] sm:$0xff]
        %v1027 = vld [vmem:[%s1025 + $0x40] sm:$0xff]
        %v1028 = vld [vmem:[%s1025 + $0x80] sm:$0xff]
        %v1029 = vld [vmem:[%s1025 + $0xc0] sm:$0xff]
        %v1030 = vld [vmem:[%s1025 + $0x100] sm:$0xff]
        %v1031 = vld [vmem:[%s1025 + $0x140] sm:$0xff]
        %v1032 = vld [vmem:[%s1025 + $0x180] sm:$0xff]
        %v1033 = vld [vmem:[%s1025 + $0x1c0] sm:$0xff]
        %v1034 = vld [vmem:[%s1025 + $0x200] sm:$0xff]
        %v1035 = vld [vmem:[%s1025 + $0x240] sm:$0xff]
        %v1036 = vld [vmem:[%s1025 + $0x280] sm:$0xff]
        %v1037 = vld [vmem:[%s1025 + $0x2c0] sm:$0xff]
        %v1038 = vld [vmem:[%s1025 + $0x300] sm:$0xff]
        %v1039 = vld [vmem:[%s1025 + $0x340] sm:$0xff]
        %v1040 = vld [vmem:[%s1025 + $0x380] sm:$0xff]
        %v1041 = vld [vmem:[%s1025 + $0x3c0] sm:$0xff]
        %1042 = vxpose.xlu0.b32.start [1/16] %v1026, 128
        %1043 = vxpose.xlu0.b32.cont [2/16] %v1027, 128
        %1044 = vxpose.xlu0.b32.cont [3/16] %v1028, 128
        %1045 = vxpose.xlu0.b32.cont [4/16] %v1029, 128
        %1046 = vxpose.xlu0.b32.cont [5/16] %v1030, 128
        %1047 = vxpose.xlu0.b32.cont [6/16] %v1031, 128
        %1048 = vxpose.xlu0.b32.cont [7/16] %v1032, 128
        %1049 = vxpose.xlu0.b32.cont [8/16] %v1033, 128
        %1050 = vxpose.xlu0.b32.cont [9/16] %v1034, 128
        %1051 = vxpose.xlu0.b32.cont [10/16] %v1035, 128
        %1052 = vxpose.xlu0.b32.cont [11/16] %v1036, 128
        %1053 = vxpose.xlu0.b32.cont [12/16] %v1037, 128
        %1054 = vxpose.xlu0.b32.cont [13/16] %v1038, 128
        %1055 = vxpose.xlu0.b32.cont [14/16] %v1039, 128
        %1056 = vxpose.xlu0.b32.cont [15/16] %v1040, 128
        %1057 = vxpose.xlu0.b32.end [16/16] %v1041, 128
        %v1058 = vpop.trf.xlu0
        %v1059 = vpop.trf.xlu0
        %v1060 = vpop.trf.xlu0
        %v1061 = vpop.trf.xlu0
        %v1062 = vpop.trf.xlu0
        %v1063 = vpop.trf.xlu0
        %v1064 = vpop.trf.xlu0
        %v1065 = vpop.trf.xlu0
        %v1066 = vpop.trf.xlu0
        %v1067 = vpop.trf.xlu0
        %v1068 = vpop.trf.xlu0
        %v1069 = vpop.trf.xlu0
        %v1070 = vpop.trf.xlu0
        %v1071 = vpop.trf.xlu0
        %v1072 = vpop.trf.xlu0
        %v1073 = vpop.trf.xlu0
        %s1074 = sadd.s32 1, %s509
        %s1075 = smul.addr %s1074, 8
        %s1076 = scalar_lea.vmem %s168, %s1075 [#allocation5]
        %1077 = vst [vmem:[%s1076] sm:$0xff] %v1058
        %1078 = vst [vmem:[%s1076 + $0x10] sm:$0xff] %v1059
        %1079 = vst [vmem:[%s1076 + $0x20] sm:$0xff] %v1060
        %1080 = vst [vmem:[%s1076 + $0x30] sm:$0xff] %v1061
        %1081 = vst [vmem:[%s1076 + $0x40] sm:$0xff] %v1062
        %1082 = vst [vmem:[%s1076 + $0x50] sm:$0xff] %v1063
        %1083 = vst [vmem:[%s1076 + $0x60] sm:$0xff] %v1064
        %1084 = vst [vmem:[%s1076 + $0x70] sm:$0xff] %v1065
        %1085 = vst [vmem:[%s1076 + $0x80] sm:$0xff] %v1066
        %1086 = vst [vmem:[%s1076 + $0x90] sm:$0xff] %v1067
        %1087 = vst [vmem:[%s1076 + $0xa0] sm:$0xff] %v1068
        %1088 = vst [vmem:[%s1076 + $0xb0] sm:$0xff] %v1069
        %1089 = vst [vmem:[%s1076 + $0xc0] sm:$0xff] %v1070
        %1090 = vst [vmem:[%s1076 + $0xd0] sm:$0xff] %v1071
        %1091 = vst [vmem:[%s1076 + $0xe0] sm:$0xff] %v1072
        %1092 = vst [vmem:[%s1076 + $0xf0] sm:$0xff] %v1073
        %s1093 = sadd.s32 5, %s742
        %s1094 = smul.addr %s1093, 8
        %s1095 = scalar_lea.vmem %s149, %s1094 [#allocation2]
        %v1096 = vld [vmem:[%s1095] sm:$0xff]
        %v1097 = vld [vmem:[%s1095 + $0x40] sm:$0xff]
        %v1098 = vld [vmem:[%s1095 + $0x80] sm:$0xff]
        %v1099 = vld [vmem:[%s1095 + $0xc0] sm:$0xff]
        %v1100 = vld [vmem:[%s1095 + $0x100] sm:$0xff]
        %v1101 = vld [vmem:[%s1095 + $0x140] sm:$0xff]
        %v1102 = vld [vmem:[%s1095 + $0x180] sm:$0xff]
        %v1103 = vld [vmem:[%s1095 + $0x1c0] sm:$0xff]
        %v1104 = vld [vmem:[%s1095 + $0x200] sm:$0xff]
        %v1105 = vld [vmem:[%s1095 + $0x240] sm:$0xff]
        %v1106 = vld [vmem:[%s1095 + $0x280] sm:$0xff]
        %v1107 = vld [vmem:[%s1095 + $0x2c0] sm:$0xff]
        %v1108 = vld [vmem:[%s1095 + $0x300] sm:$0xff]
        %v1109 = vld [vmem:[%s1095 + $0x340] sm:$0xff]
        %v1110 = vld [vmem:[%s1095 + $0x380] sm:$0xff]
        %v1111 = vld [vmem:[%s1095 + $0x3c0] sm:$0xff]
        %1112 = vxpose.xlu0.b32.start [1/16] %v1096, 128
        %1113 = vxpose.xlu0.b32.cont [2/16] %v1097, 128
        %1114 = vxpose.xlu0.b32.cont [3/16] %v1098, 128
        %1115 = vxpose.xlu0.b32.cont [4/16] %v1099, 128
        %1116 = vxpose.xlu0.b32.cont [5/16] %v1100, 128
        %1117 = vxpose.xlu0.b32.cont [6/16] %v1101, 128
        %1118 = vxpose.xlu0.b32.cont [7/16] %v1102, 128
        %1119 = vxpose.xlu0.b32.cont [8/16] %v1103, 128
        %1120 = vxpose.xlu0.b32.cont [9/16] %v1104, 128
        %1121 = vxpose.xlu0.b32.cont [10/16] %v1105, 128
        %1122 = vxpose.xlu0.b32.cont [11/16] %v1106, 128
        %1123 = vxpose.xlu0.b32.cont [12/16] %v1107, 128
        %1124 = vxpose.xlu0.b32.cont [13/16] %v1108, 128
        %1125 = vxpose.xlu0.b32.cont [14/16] %v1109, 128
        %1126 = vxpose.xlu0.b32.cont [15/16] %v1110, 128
        %1127 = vxpose.xlu0.b32.end [16/16] %v1111, 128
        %v1128 = vpop.trf.xlu0
        %v1129 = vpop.trf.xlu0
        %v1130 = vpop.trf.xlu0
        %v1131 = vpop.trf.xlu0
        %v1132 = vpop.trf.xlu0
        %v1133 = vpop.trf.xlu0
        %v1134 = vpop.trf.xlu0
        %v1135 = vpop.trf.xlu0
        %v1136 = vpop.trf.xlu0
        %v1137 = vpop.trf.xlu0
        %v1138 = vpop.trf.xlu0
        %v1139 = vpop.trf.xlu0
        %v1140 = vpop.trf.xlu0
        %v1141 = vpop.trf.xlu0
        %v1142 = vpop.trf.xlu0
        %v1143 = vpop.trf.xlu0
        %s1144 = sadd.s32 1, %s580
        %s1145 = smul.addr %s1144, 8
        %s1146 = scalar_lea.vmem %s168, %s1145 [#allocation5]
        %1147 = vst [vmem:[%s1146] sm:$0xff] %v1128
        %1148 = vst [vmem:[%s1146 + $0x10] sm:$0xff] %v1129
        %1149 = vst [vmem:[%s1146 + $0x20] sm:$0xff] %v1130
        %1150 = vst [vmem:[%s1146 + $0x30] sm:$0xff] %v1131
        %1151 = vst [vmem:[%s1146 + $0x40] sm:$0xff] %v1132
        %1152 = vst [vmem:[%s1146 + $0x50] sm:$0xff] %v1133
        %1153 = vst [vmem:[%s1146 + $0x60] sm:$0xff] %v1134
        %1154 = vst [vmem:[%s1146 + $0x70] sm:$0xff] %v1135
        %1155 = vst [vmem:[%s1146 + $0x80] sm:$0xff] %v1136
        %1156 = vst [vmem:[%s1146 + $0x90] sm:$0xff] %v1137
        %1157 = vst [vmem:[%s1146 + $0xa0] sm:$0xff] %v1138
        %1158 = vst [vmem:[%s1146 + $0xb0] sm:$0xff] %v1139
        %1159 = vst [vmem:[%s1146 + $0xc0] sm:$0xff] %v1140
        %1160 = vst [vmem:[%s1146 + $0xd0] sm:$0xff] %v1141
        %1161 = vst [vmem:[%s1146 + $0xe0] sm:$0xff] %v1142
        %1162 = vst [vmem:[%s1146 + $0xf0] sm:$0xff] %v1143
        %s1163 = sadd.s32 6, %s742
        %s1164 = smul.addr %s1163, 8
        %s1165 = scalar_lea.vmem %s149, %s1164 [#allocation2]
        %v1166 = vld [vmem:[%s1165] sm:$0xff]
        %v1167 = vld [vmem:[%s1165 + $0x40] sm:$0xff]
        %v1168 = vld [vmem:[%s1165 + $0x80] sm:$0xff]
        %v1169 = vld [vmem:[%s1165 + $0xc0] sm:$0xff]
        %v1170 = vld [vmem:[%s1165 + $0x100] sm:$0xff]
        %v1171 = vld [vmem:[%s1165 + $0x140] sm:$0xff]
        %v1172 = vld [vmem:[%s1165 + $0x180] sm:$0xff]
        %v1173 = vld [vmem:[%s1165 + $0x1c0] sm:$0xff]
        %v1174 = vld [vmem:[%s1165 + $0x200] sm:$0xff]
        %v1175 = vld [vmem:[%s1165 + $0x240] sm:$0xff]
        %v1176 = vld [vmem:[%s1165 + $0x280] sm:$0xff]
        %v1177 = vld [vmem:[%s1165 + $0x2c0] sm:$0xff]
        %v1178 = vld [vmem:[%s1165 + $0x300] sm:$0xff]
        %v1179 = vld [vmem:[%s1165 + $0x340] sm:$0xff]
        %v1180 = vld [vmem:[%s1165 + $0x380] sm:$0xff]
        %v1181 = vld [vmem:[%s1165 + $0x3c0] sm:$0xff]
        %1182 = vxpose.xlu0.b32.start [1/16] %v1166, 128
        %1183 = vxpose.xlu0.b32.cont [2/16] %v1167, 128
        %1184 = vxpose.xlu0.b32.cont [3/16] %v1168, 128
        %1185 = vxpose.xlu0.b32.cont [4/16] %v1169, 128
        %1186 = vxpose.xlu0.b32.cont [5/16] %v1170, 128
        %1187 = vxpose.xlu0.b32.cont [6/16] %v1171, 128
        %1188 = vxpose.xlu0.b32.cont [7/16] %v1172, 128
        %1189 = vxpose.xlu0.b32.cont [8/16] %v1173, 128
        %1190 = vxpose.xlu0.b32.cont [9/16] %v1174, 128
        %1191 = vxpose.xlu0.b32.cont [10/16] %v1175, 128
        %1192 = vxpose.xlu0.b32.cont [11/16] %v1176, 128
        %1193 = vxpose.xlu0.b32.cont [12/16] %v1177, 128
        %1194 = vxpose.xlu0.b32.cont [13/16] %v1178, 128
        %1195 = vxpose.xlu0.b32.cont [14/16] %v1179, 128
        %1196 = vxpose.xlu0.b32.cont [15/16] %v1180, 128
        %1197 = vxpose.xlu0.b32.end [16/16] %v1181, 128
        %v1198 = vpop.trf.xlu0
        %v1199 = vpop.trf.xlu0
        %v1200 = vpop.trf.xlu0
        %v1201 = vpop.trf.xlu0
        %v1202 = vpop.trf.xlu0
        %v1203 = vpop.trf.xlu0
        %v1204 = vpop.trf.xlu0
        %v1205 = vpop.trf.xlu0
        %v1206 = vpop.trf.xlu0
        %v1207 = vpop.trf.xlu0
        %v1208 = vpop.trf.xlu0
        %v1209 = vpop.trf.xlu0
        %v1210 = vpop.trf.xlu0
        %v1211 = vpop.trf.xlu0
        %v1212 = vpop.trf.xlu0
        %v1213 = vpop.trf.xlu0
        %s1214 = sadd.s32 1, %s651
        %s1215 = smul.addr %s1214, 8
        %s1216 = scalar_lea.vmem %s168, %s1215 [#allocation5]
        %1217 = vst [vmem:[%s1216] sm:$0xff] %v1198
        %1218 = vst [vmem:[%s1216 + $0x10] sm:$0xff] %v1199
        %1219 = vst [vmem:[%s1216 + $0x20] sm:$0xff] %v1200
        %1220 = vst [vmem:[%s1216 + $0x30] sm:$0xff] %v1201
        %1221 = vst [vmem:[%s1216 + $0x40] sm:$0xff] %v1202
        %1222 = vst [vmem:[%s1216 + $0x50] sm:$0xff] %v1203
        %1223 = vst [vmem:[%s1216 + $0x60] sm:$0xff] %v1204
        %1224 = vst [vmem:[%s1216 + $0x70] sm:$0xff] %v1205
        %1225 = vst [vmem:[%s1216 + $0x80] sm:$0xff] %v1206
        %1226 = vst [vmem:[%s1216 + $0x90] sm:$0xff] %v1207
        %1227 = vst [vmem:[%s1216 + $0xa0] sm:$0xff] %v1208
        %1228 = vst [vmem:[%s1216 + $0xb0] sm:$0xff] %v1209
        %1229 = vst [vmem:[%s1216 + $0xc0] sm:$0xff] %v1210
        %1230 = vst [vmem:[%s1216 + $0xd0] sm:$0xff] %v1211
        %1231 = vst [vmem:[%s1216 + $0xe0] sm:$0xff] %v1212
        %1232 = vst [vmem:[%s1216 + $0xf0] sm:$0xff] %v1213
        %s1233 = sadd.s32 7, %s742
        %s1234 = smul.addr %s1233, 8
        %s1235 = scalar_lea.vmem %s149, %s1234 [#allocation2]
        %v1236 = vld [vmem:[%s1235] sm:$0xff]
        %v1237 = vld [vmem:[%s1235 + $0x40] sm:$0xff]
        %v1238 = vld [vmem:[%s1235 + $0x80] sm:$0xff]
        %v1239 = vld [vmem:[%s1235 + $0xc0] sm:$0xff]
        %v1240 = vld [vmem:[%s1235 + $0x100] sm:$0xff]
        %v1241 = vld [vmem:[%s1235 + $0x140] sm:$0xff]
        %v1242 = vld [vmem:[%s1235 + $0x180] sm:$0xff]
        %v1243 = vld [vmem:[%s1235 + $0x1c0] sm:$0xff]
        %v1244 = vld [vmem:[%s1235 + $0x200] sm:$0xff]
        %v1245 = vld [vmem:[%s1235 + $0x240] sm:$0xff]
        %v1246 = vld [vmem:[%s1235 + $0x280] sm:$0xff]
        %v1247 = vld [vmem:[%s1235 + $0x2c0] sm:$0xff]
        %v1248 = vld [vmem:[%s1235 + $0x300] sm:$0xff]
        %v1249 = vld [vmem:[%s1235 + $0x340] sm:$0xff]
        %v1250 = vld [vmem:[%s1235 + $0x380] sm:$0xff]
        %v1251 = vld [vmem:[%s1235 + $0x3c0] sm:$0xff]
        %1252 = vxpose.xlu0.b32.start [1/16] %v1236, 128
        %1253 = vxpose.xlu0.b32.cont [2/16] %v1237, 128
        %1254 = vxpose.xlu0.b32.cont [3/16] %v1238, 128
        %1255 = vxpose.xlu0.b32.cont [4/16] %v1239, 128
        %1256 = vxpose.xlu0.b32.cont [5/16] %v1240, 128
        %1257 = vxpose.xlu0.b32.cont [6/16] %v1241, 128
        %1258 = vxpose.xlu0.b32.cont [7/16] %v1242, 128
        %1259 = vxpose.xlu0.b32.cont [8/16] %v1243, 128
        %1260 = vxpose.xlu0.b32.cont [9/16] %v1244, 128
        %1261 = vxpose.xlu0.b32.cont [10/16] %v1245, 128
        %1262 = vxpose.xlu0.b32.cont [11/16] %v1246, 128
        %1263 = vxpose.xlu0.b32.cont [12/16] %v1247, 128
        %1264 = vxpose.xlu0.b32.cont [13/16] %v1248, 128
        %1265 = vxpose.xlu0.b32.cont [14/16] %v1249, 128
        %1266 = vxpose.xlu0.b32.cont [15/16] %v1250, 128
        %1267 = vxpose.xlu0.b32.end [16/16] %v1251, 128
        %v1268 = vpop.trf.xlu0
        %v1269 = vpop.trf.xlu0
        %v1270 = vpop.trf.xlu0
        %v1271 = vpop.trf.xlu0
        %v1272 = vpop.trf.xlu0
        %v1273 = vpop.trf.xlu0
        %v1274 = vpop.trf.xlu0
        %v1275 = vpop.trf.xlu0
        %v1276 = vpop.trf.xlu0
        %v1277 = vpop.trf.xlu0
        %v1278 = vpop.trf.xlu0
        %v1279 = vpop.trf.xlu0
        %v1280 = vpop.trf.xlu0
        %v1281 = vpop.trf.xlu0
        %v1282 = vpop.trf.xlu0
        %v1283 = vpop.trf.xlu0
        %s1284 = sadd.s32 1, %s722
        %s1285 = smul.addr %s1284, 8
        %s1286 = scalar_lea.vmem %s168, %s1285 [#allocation5]
        %1287 = vst [vmem:[%s1286] sm:$0xff] %v1268
        %1288 = vst [vmem:[%s1286 + $0x10] sm:$0xff] %v1269
        %1289 = vst [vmem:[%s1286 + $0x20] sm:$0xff] %v1270
        %1290 = vst [vmem:[%s1286 + $0x30] sm:$0xff] %v1271
        %1291 = vst [vmem:[%s1286 + $0x40] sm:$0xff] %v1272
        %1292 = vst [vmem:[%s1286 + $0x50] sm:$0xff] %v1273
        %1293 = vst [vmem:[%s1286 + $0x60] sm:$0xff] %v1274
        %1294 = vst [vmem:[%s1286 + $0x70] sm:$0xff] %v1275
        %1295 = vst [vmem:[%s1286 + $0x80] sm:$0xff] %v1276
        %1296 = vst [vmem:[%s1286 + $0x90] sm:$0xff] %v1277
        %1297 = vst [vmem:[%s1286 + $0xa0] sm:$0xff] %v1278
        %1298 = vst [vmem:[%s1286 + $0xb0] sm:$0xff] %v1279
        %1299 = vst [vmem:[%s1286 + $0xc0] sm:$0xff] %v1280
        %1300 = vst [vmem:[%s1286 + $0xd0] sm:$0xff] %v1281
        %1301 = vst [vmem:[%s1286 + $0xe0] sm:$0xff] %v1282
        %1302 = vst [vmem:[%s1286 + $0xf0] sm:$0xff] %v1283
        %s1303 = sand.u32 %s79, 1
        %s1304 = scalar_lea.sflag [#allocation4], %s1303
        %s1305 = sand.u32 %s79, 1
        %s1306 = smul.addr %s1305, 2048
        %s1307 = scalar_lea.vmem [#allocation5], %s1306
        // Predicated region
        $region29: #{_transpose_1_2_pallas.1} parent=23 // pred_check
          %p1308 = pneg %p89
        $region30: #{_transpose_1_2_pallas.1} parent=23 // pred_check_branch
          %1310 = sbr.rel (%p1308) target = $region32
        $region31: #{_transpose_1_2_pallas.1} parent=23 // pred_region
          %s1311 = smul.u32 128, %s25
          %s1312 = smul.u32 2, %s24
          %1314 = vsyncadd %s1304, 0
          %s1315 = smul.addr %s1311, 2
          %s1316 = sadd.s32 %s1312, %s1315
          %s1317 = smul.addr %s23, 256
          %s1318 = sadd.s32 %s1316, %s1317
          %s1319 = smul.addr %s1318, 8
          %s1320 = scalar_lea.hbm %s1, %s1319
          %s1321 = sshll.u32 %s1307, 4
          %s1322 = int_to_ptr.vmem [resolvable:$true] %s1321
          %s1323 = sshll.u32 %s1320, 4
          %s1324 = int_to_ptr.hbm [resolvable:$true] %s1323
          %1329 = dma.vmem_to_hbm [thread:$0]  %s1322, 32768, %s1324, %s1304, 256, 256, 16
        $region32: #{_transpose_1_2_pallas.1} parent=23 // pred_fallthru
          _
      $region24: #{_transpose_1_2_pallas.1} parent=5 // pred_fallthru
        _
      %p1330 = scmp.le.s32.totalorder 2, %s13
      // Predicated region
      $region33: #{_transpose_1_2_pallas.1} parent=5 // pred_check
        %p1331 = pneg %p1330
      $region34: #{_transpose_1_2_pallas.1} parent=5 // pred_check_branch
        %1333 = sbr.rel (%p1331) target = $region36
      $region35: #{_transpose_1_2_pallas.1} parent=5 // pred_region
        %s1334 = ssub.s32 %s13, 2
        // Predicated region
        $region37: #{_transpose_1_2_pallas.1} parent=35 // pred_check
          %p1335 = pneg %p95
        $region38: #{_transpose_1_2_pallas.1} parent=35 // pred_check_branch
          %1337 = sbr.rel (%p1335) target = $region40
        $region39: #{_transpose_1_2_pallas.1} parent=35 // pred_region
          %s1338 = sand.u32 %s80, 1
          %s1339 = scalar_lea.sflag [#allocation4], %s1338
          %s1340 = sand.u32 %s80, 1
          %s1341 = smul.addr %s1340, 2048
          %s1342 = scalar_lea.vmem [#allocation5], %s1341
          %1344 = dma.done %s1339, 32768
        $region40: #{_transpose_1_2_pallas.1} parent=35 // pred_fallthru
          _
      $region36: #{_transpose_1_2_pallas.1} parent=5 // pred_fallthru
        _
    $region6: #{_transpose_1_2_pallas.1} parent=1 // loop_footer
      %s17 = sadd.s32 1, %s13
    $region7: #{_transpose_1_2_pallas.1} parent=1 // loop_footer_branch
      %12 = sbr.rel target = $region3
    $region8: #{_transpose_1_2_pallas.1} parent=1 // loop_exit
      _
    %1345 = vsyncpa [#allocation3], 1
    %s1346 = scalar_lea.sflag [#allocation3], 1
    %1347 = vsyncpa %s1346, 1
    %1348 = vsyncpa [#allocation4], 1
    %s1349 = scalar_lea.sflag [#allocation4], 1
    %1350 = vsyncpa %s1349, 1

</llo_original>
